<compile_context>
chip_gen: v7x
topology: tpu7x:2x2x1
jax: 0.10.0
libtpu: 0.0.40
codegen_flags: <defaults>
</compile_context>

<pallas_src>
import functools

import numpy as np
import jax
import jax.numpy as jnp
from jax.experimental import pallas as pl
from jax.experimental.pallas import tpu as pltpu


# ---------------------------------------------------------------------------
# Kernel: one group of R patch rows.
#   x_ref : (R*w, C)            f32 patch embeddings (cast to bf16 in-kernel)
#   w_ref : (C, P*P*out_ch)     bf16 flattened ConvTranspose2d weight (VMEM-resident)
#   o_ref : (R*P, w*P*out_ch)   output pixel rows, lane-dense columns
# ---------------------------------------------------------------------------
def _unpatchify_kernel(x_ref, w_ref, o_ref, *, rows, w, patch, pxl_cols):
    # In-kernel bf16 cast: x crosses HBM exactly once, as f32 (no wrapper cast pass).
    x = x_ref[...].astype(jnp.bfloat16)
    # MXU matmul with f32 accumulation: (R*w, C) @ (C, P*P*oc).
    y = jnp.dot(x, w_ref[...], preferred_element_type=jnp.float32)
    # Fused patch-row interleave (previously a post-kernel 6-D XLA transpose):
    # (R*w, P*P*oc) -> (R, w, P, P*oc) -> (R, P, w, P*oc) -> (R*P, w*P*oc).
    # Pure in-VMEM XLU/relayout work; hides under the HBM-bound regime.
    y = y.reshape(rows, w, patch, pxl_cols)
    y = jnp.transpose(y, (0, 2, 1, 3))
    o_ref[...] = y.reshape(rows * patch, w * pxl_cols).astype(o_ref.dtype)


def _pallas_unpatchify(x_flat, w_flat, *, rows, w, patch, out_ch, out_dtype):
    M, C = x_flat.shape
    N = w_flat.shape[1]
    n_rows = M // w
    grid = n_rows // rows
    pxl_cols = patch * out_ch
    out_rows = n_rows * patch
    out_cols = w * pxl_cols  # lane-dense when w*patch*out_ch % 128 == 0 (w % 8 == 0 for P=16, oc=3)

    kernel = functools.partial(
        _unpatchify_kernel, rows=rows, w=w, patch=patch, pxl_cols=pxl_cols
    )
    return pl.pallas_call(
        kernel,
        out_shape=jax.ShapeDtypeStruct((out_rows, out_cols), out_dtype),
        grid_spec=pltpu.PrefetchScalarGridSpec(
            num_scalar_prefetch=0,
            grid=(grid,),
            in_specs=[
                pl.BlockSpec((rows * w, C), lambda g: (g, 0)),
                # Constant block index: the whole weight is DMA'd once and stays resident.
                pl.BlockSpec((C, N), lambda g: (0, 0)),
            ],
            out_specs=pl.BlockSpec((rows * patch, out_cols), lambda g: (g, 0)),
        ),
        compiler_params=pltpu.CompilerParams(
            dimension_semantics=("parallel",),
        ),
    )(x_flat, w_flat)


def _choose_rows_per_step(n_rows, w, patch, latent, out_cols, in_item, out_item, row_align):
    """Pick R = patch rows per grid step.

    Constraints:
      * R divides n_rows (exact blocks, no partial tiles),
      * (R*w) % row_align == 0 (sublane-aligned matmul block),
      * double-buffered (x block + out block) stays under ~12 MiB (v5e-safe),
      * prefer >= 2 grid steps so v7x's two TensorCores both get work.
    """
    per_row = 2 * (w * latent * in_item + patch * out_cols * out_item)  # double-buffered
    budget = 12 * 1024 * 1024
    r_cap = max(1, budget // max(per_row, 1))
    cands = [
        r for r in range(1, n_rows + 1)
        if n_rows % r == 0 and (r * w) % row_align == 0 and r <= r_cap
    ]
    if not cands:
        # Whole-array block: block dims equal the full array dims, always legal.
        return n_rows
    multi = [r for r in cands if n_rows // r >= 2]
    return max(multi) if multi else max(cands)


# ---------------------------------------------------------------------------
# UnpatchifyLinear forward.
# ---------------------------------------------------------------------------
def unpatchify_linear(x, weight, *, patch_size, out_dtype=None):
    """
    x:      (B, h, w, latent_dim)   channels-last patch embeddings
    weight: (latent_dim, 3, P, P)   ConvTranspose2d weight (in_ch, out_ch, kH, kW)
    returns (B, h*P, w*P, 3) in `out_dtype` (default: x.dtype; pass bf16 to halve the
            dominant HBM write stream if the consumer tolerates it).
    """
    B, h, w, C = x.shape
    P = patch_size
    out_ch = weight.shape[1]
    assert weight.shape == (C, out_ch, P, P)
    if out_dtype is None:
        out_dtype = x.dtype

    # Flatten weight so matmul columns are ordered (ph, pw, o):
    #   W_flat[c, ph*P*out_ch + pw*out_ch + o] = weight[c, o, ph, pw]
    # TODO(synk): in a real model, precompute/cache w_flat once per weight (it is tiny)
    # instead of re-deriving it on every call.
    w_flat = jnp.transpose(weight, (0, 2, 3, 1)).reshape(C, P * P * out_ch)
    w_flat = w_flat.astype(jnp.bfloat16)

    # Free reshape (contiguous); x stays in its input dtype — the bf16 cast is in-kernel.
    x_flat = x.reshape(B * h * w, C)

    n_rows = B * h
    row_align = 8 if x.dtype.itemsize >= 4 else 16
    rows = _choose_rows_per_step(
        n_rows, w, P, C,
        out_cols=w * P * out_ch,
        in_item=x.dtype.itemsize,
        out_item=np.dtype(out_dtype).itemsize,
        row_align=row_align,
    )

    y = _pallas_unpatchify(
        x_flat, w_flat, rows=rows, w=w, patch=P, out_ch=out_ch, out_dtype=out_dtype
    )  # (B*h*P, w*P*out_ch)

    # Pure metadata reshape — no extra HBM pass (the interleave already happened in-kernel).
    return y.reshape(B, h * P, w * P, out_ch)


# ---------------------------------------------------------------------------
# Reference (plain JAX, f32) for correctness check.
# ---------------------------------------------------------------------------
def unpatchify_linear_ref(x, weight, *, patch_size):
    B, h, w, C = x.shape
    P = patch_size
    out_ch = weight.shape[1]
    # out[b, i*P+ph, j*P+pw, o] = sum_c x[b, i, j, c] * weight[c, o, ph, pw]
    y = jnp.einsum("bijc,copq->bipjqo", x, weight)
    return y.reshape(B, h * P, w * P, out_ch)


if __name__ == "__main__":
    patch_size = 16
    latent_dim = 256
    out_ch = 3
    B, h, w = 2, 4, 4  # small spatial grid of patches

    key = jax.random.PRNGKey(0)
    kx, kw = jax.random.split(key)
    # ConvTranspose2d weight shape: (in_channels, out_channels, kH, kW).
    weight = jax.random.normal(
        kw, (latent_dim, out_ch, patch_size, patch_size), dtype=jnp.float32
    ) * 0.02
    x = jax.random.normal(kx, (B, h, w, latent_dim), dtype=jnp.float32)

    out = unpatchify_linear(x, weight, patch_size=patch_size)
    out = jax.block_until_ready(out)

    ref = unpatchify_linear_ref(x, weight, patch_size=patch_size)
    assert out.shape == (B, h * patch_size, w * patch_size, out_ch), out.shape
    # bf16 MXU operands with f32 accumulation -> looser tolerance vs f32 reference.
    max_err = float(jnp.max(jnp.abs(out - ref)))
    assert jnp.allclose(out, ref, atol=3e-2, rtol=3e-2), (
        f"mismatch vs reference; max abs err = {max_err}"
    )

    print("KERNEL_OK")
</pallas_src>

<mosaic_0001>
module attributes {stable_mosaic.version = 11 : i64} {
  func.func @_unpatchify_kernel(%arg0: i32, %arg1: memref<16x256xf32, #tpu.memory_space<vmem>>, %arg2: memref<256x768xbf16, #tpu.memory_space<vmem>>, %arg3: memref<64x192xf32, #tpu.memory_space<vmem>>) attributes {dimension_semantics = [#tpu.dimension_semantics<parallel>], iteration_bounds = array<i64: 2>, scalar_prefetch = 0 : i64, scratch_operands = 0 : i64, tpu.core_type = #tpu.core_type<tc>, window_params = [{transform_indices = @transform_0, window_bounds = array<i64: 16, 256>}, {pipeline_mode = #tpu.pipeline_mode<synchronous>, transform_indices = @transform_1, window_bounds = array<i64: 256, 768>}, {transform_indices = @transform_2, window_bounds = array<i64: 64, 192>}]} {
    %c0 = arith.constant 0 : index
    %c0_0 = arith.constant 0 : index
    %0 = vector.load %arg1[%c0, %c0_0] : memref<16x256xf32, #tpu.memory_space<vmem>>, vector<16x256xf32>
    %1 = arith.truncf %0 : vector<16x256xf32> to vector<16x256xbf16>
    %c0_1 = arith.constant 0 : index
    %c0_2 = arith.constant 0 : index
    %2 = vector.load %arg2[%c0_1, %c0_2] : memref<256x768xbf16, #tpu.memory_space<vmem>>, vector<256x768xbf16>
    %cst = arith.constant dense<0.000000e+00> : vector<16x768xf32>
    %3 = tpu.matmul %1, %2, %cst {dimension_numbers = #tpu.dot_dimension_numbers<[1], [0], [0], [1], [0, 0, 1, 1], [], []>} : vector<16x256xbf16>, vector<256x768xbf16>, vector<16x768xf32> -> vector<16x768xf32>
    %4 = vector.shape_cast %3 : vector<16x768xf32> to vector<4x4x16x48xf32>
    %5 = tpu.transpose %4, [0, 2, 1, 3] : vector<4x4x16x48xf32> -> vector<4x16x4x48xf32>
    %6 = vector.shape_cast %5 : vector<4x16x4x48xf32> to vector<64x192xf32>
    %c0_3 = arith.constant 0 : index
    %c0_4 = arith.constant 0 : index
    %7 = vector.load %arg3[%c0_3, %c0_4] : memref<64x192xf32, #tpu.memory_space<vmem>>, vector<64x192xf32>
    tpu.vector_store %arg3[%c0_3, %c0_4], %6 {strides = array<i32>} : memref<64x192xf32, #tpu.memory_space<vmem>>, vector<64x192xf32>,
    return
  }
  func.func @transform_0(%arg0: i32) -> (i32, i32) {
    %c0_i32 = arith.constant 0 : i32
    %c0_i32_0 = arith.constant 0 : i32
    return %arg0, %c0_i32 : i32, i32
  }
  func.func @transform_1(%arg0: i32) -> (i32, i32) {
    %c0_i32 = arith.constant 0 : i32
    %c0_i32_0 = arith.constant 0 : i32
    %c0_i32_1 = arith.constant 0 : i32
    return %c0_i32, %c0_i32_0 : i32, i32
  }
  func.func @transform_2(%arg0: i32) -> (i32, i32) {
    %c0_i32 = arith.constant 0 : i32
    %c0_i32_0 = arith.constant 0 : i32
    return %arg0, %c0_i32 : i32, i32
  }
}

</mosaic_0001>

<llo_original>
// kernel: tpu_custom_call.1
$region0: #{tpu_custom_call.1}
  #allocation0 [shape = 'u32[]', space=smem, size = 0x4, offset = 0x4, fixed_abs, tag = 'smem constant byte address 0x4 - core index']
  #allocation1 [shape = 'u32[144,128]{1,0:T(1,128)}', space=vmem, size = 0x12000, scoped, tag = 'internal scratch']
  %s0 = inlined_call_operand.hbm [shape: f32[32,256], index: 0, kind: input, shape index: {}]
  %s1 = inlined_call_operand.hbm [shape: bf16[256,768], index: 1, kind: input, shape index: {}]
  %s2 = inlined_call_operand.vmem [shape: f32[128,192], index: 2, kind: output, shape index: {}]
  %s3 = sld [smem:[#allocation0]]
  $region49: #{tpu_custom_call.1} parent=0
    _
  %s5 = ssub.s32 1, %s3
  %s6 = scalar_select 0, %s5, %s3
  $region1: #{tpu_custom_call.1} parent=0
    #allocation2 [shape = 'u8[32768]{0}', space=vmem, size = 0x8000, scoped, tag = 'input window, operand 0']
    #allocation3 [shape = 's32[2]{0}', space=sflag, size = 0x8, scoped, tag = 'scoped memory for tpu_custom_call.1']
    #allocation4 [shape = 'u8[393216]{0}', space=vmem, size = 0x60000, scoped, tag = 'input window, operand 1, single buffered']
    #allocation5 [shape = 's32[1]{0}', space=sflag, size = 0x4, scoped, tag = 'scoped memory for tpu_custom_call.1']
    %7 = vsyncpa [#allocation3], 0
    %s8 = scalar_lea.sflag [#allocation3], 1
    %9 = vsyncpa %s8, 0
    %10 = vsyncpa [#allocation5], 0
    loop: start=0, step=1, limit=4
    $region2: #{tpu_custom_call.1} parent=1 // loop_pre_header
      _
    $region3: #{tpu_custom_call.1} parent=1 // loop_header
      %s12 = sphi 0, %s16
      %p13 = scmp.ge.s32.totalorder %s12, 4
      %s22 = sphi 0, %s24
      %s25 = sphi 0, %s22
      %s26 = sphi 0, %s25
      %s42 = sphi 0, %s26
      %s46 = sphi 0, %s46
      %s48 = sphi 0, %s46
      %s49 = sphi 0, %s48
      %s63 = sphi 0, %s49
      %s69 = sphi 0, %s71
      %s72 = sphi 0, %s69
      %s73 = sphi 0, %s72
      %s89 = sphi 0, %s73
    $region4: #{tpu_custom_call.1} parent=1 // loop_header_branch
      %15 = sbr.rel (%p13) target = $region8
    $region5: #{tpu_custom_call.1} parent=1 // loop_body
      %s17 = ssub.s32 %s12, 1
      %s18 = ssub.s32 %s12, 2
      %s19 = sadd.s32 %s12, 1
      %s20 = ssub.s32 %s12, %s19
      %p21 = scmp.eq.s32.totalorder %s20, 0
      %s23 = sadd.s32 %s22, 1
      %s24 = scalar_select %p21, %s22, %s23
      %p27 = pneg %p21
      %p28 = scmp.eq.s32.totalorder %s12, 1
      %p29 = por %p27, %p28
      %p30 = scmp.ne.s32.totalorder %s22, %s25
      %p31 = scmp.eq.s32.totalorder %s12, 0
      %p32 = por %p30, %p31
      %p33 = scmp.ne.s32.totalorder %s22, %s25
      %p34 = scmp.eq.s32.totalorder %s17, 1
      %p35 = por %p33, %p34
      %p36 = scmp.ne.s32.totalorder %s25, %s26
      %p37 = scmp.eq.s32.totalorder %s17, 0
      %p38 = por %p36, %p37
      %p39 = scmp.ne.s32.totalorder %s25, %s26
      %p40 = scmp.eq.s32.totalorder %s18, 1
      %p41 = por %p39, %p40
      %p43 = scmp.ne.s32.totalorder %s26, %s42
      %p44 = scmp.eq.s32.totalorder %s18, 0
      %p45 = por %p43, %p44
      %s47 = sadd.s32 %s46, 1
      %p50 = scmp.eq.s32.totalorder %s12, 1
      %p51 = scmp.ne.s32.totalorder %s46, %s48
      %p52 = scmp.eq.s32.totalorder %s12, 0
      %p53 = por %p51, %p52
      %p54 = scmp.ne.s32.totalorder %s46, %s48
      %p55 = scmp.eq.s32.totalorder %s17, 1
      %p56 = por %p54, %p55
      %p57 = scmp.ne.s32.totalorder %s48, %s49
      %p58 = scmp.eq.s32.totalorder %s17, 0
      %p59 = por %p57, %p58
      %p60 = scmp.ne.s32.totalorder %s48, %s49
      %p61 = scmp.eq.s32.totalorder %s18, 1
      %p62 = por %p60, %p61
      %p64 = scmp.ne.s32.totalorder %s49, %s63
      %p65 = scmp.eq.s32.totalorder %s18, 0
      %p66 = por %p64, %p65
      %s67 = ssub.s32 %s12, %s19
      %p68 = scmp.eq.s32.totalorder %s67, 0
      %s70 = sadd.s32 %s69, 1
      %s71 = scalar_select %p68, %s69, %s70
      %p74 = pneg %p68
      %p75 = scmp.eq.s32.totalorder %s12, 1
      %p76 = por %p74, %p75
      %p77 = scmp.ne.s32.totalorder %s69, %s72
      %p78 = scmp.eq.s32.totalorder %s12, 0
      %p79 = por %p77, %p78
      %p80 = scmp.ne.s32.totalorder %s69, %s72
      %p81 = scmp.eq.s32.totalorder %s17, 1
      %p82 = por %p80, %p81
      %p83 = scmp.ne.s32.totalorder %s72, %s73
      %p84 = scmp.eq.s32.totalorder %s17, 0
      %p85 = por %p83, %p84
      %p86 = scmp.ne.s32.totalorder %s72, %s73
      %p87 = scmp.eq.s32.totalorder %s18, 1
      %p88 = por %p86, %p87
      %p90 = scmp.ne.s32.totalorder %s73, %s89
      %p91 = scmp.eq.s32.totalorder %s18, 0
      %p92 = por %p90, %p91
      %p93 = scmp.le.s32.totalorder 1, %s12
      %p94 = scmp.lt.s32.totalorder %s12, 3
      %p95 = pnand %p93, %p94
      %p96 = pneg %p95
      // Predicated region
      $region9: #{tpu_custom_call.1} parent=5 // pred_check
        _
      $region10: #{tpu_custom_call.1} parent=5 // pred_check_branch
        %98 = sbr.rel (%p95) target = $region12
      $region11: #{tpu_custom_call.1} parent=5 // pred_region
        %s99 = ssub.s32 %s12, 1
        // Predicated region
        $region13: #{tpu_custom_call.1} parent=11 // pred_check
          %p100 = pneg %p59
        $region14: #{tpu_custom_call.1} parent=11 // pred_check_branch
          %102 = sbr.rel (%p100) target = $region16
        $region15: #{tpu_custom_call.1} parent=11 // pred_region
          %s104 = ssub.s32 12288, 12288
          %105 = vsyncadd [#allocation5], %s104
          %s106 = sshll.u32 [#allocation4], 4
          %s107 = int_to_ptr.vmem [resolvable:$true] %s106
          %112 = dma.hbm_to_vmem [thread:$0]  %s1, 12288, %s107, [#allocation5], 384, 384, 24
        $region16: #{tpu_custom_call.1} parent=11 // pred_fallthru
          _
      $region12: #{tpu_custom_call.1} parent=5 // pred_fallthru
        _
      %p113 = scmp.lt.s32.totalorder %s12, 2
      // Predicated region
      $region17: #{tpu_custom_call.1} parent=5 // pred_check
        %p114 = pneg %p113
      $region18: #{tpu_custom_call.1} parent=5 // pred_check_branch
        %116 = sbr.rel (%p114) target = $region20
      $region19: #{tpu_custom_call.1} parent=5 // pred_region
        // Predicated region
        $region21: #{tpu_custom_call.1} parent=19 // pred_check
          %p117 = pneg %p32
        $region22: #{tpu_custom_call.1} parent=19 // pred_check_branch
          %119 = sbr.rel (%p117) target = $region24
        $region23: #{tpu_custom_call.1} parent=19 // pred_region
          %s120 = sand.u32 %s22, 1
          %s121 = scalar_lea.sflag [#allocation3], %s120
          %s122 = sand.u32 %s22, 1
          %s123 = smul.addr %s122, 32
          %s124 = scalar_lea.vmem [#allocation2], %s123
          %s125 = smul.u32 2, %s12
          %s127 = ssub.s32 512, 512
          %128 = vsyncadd %s121, %s127
          %s129 = smul.addr %s125, 2
          %s130 = smul.addr %s129, 128
          %s131 = scalar_lea.hbm %s0, %s130
          %s132 = sshll.u32 %s124, 4
          %s133 = int_to_ptr.vmem [resolvable:$true] %s132
          %138 = dma.hbm_to_vmem [thread:$0]  %s131, 512, %s133, %s121, 256, 256, 16
        $region24: #{tpu_custom_call.1} parent=19 // pred_fallthru
          _
      $region20: #{tpu_custom_call.1} parent=5 // pred_fallthru
        _
      %p139 = scmp.le.s32.totalorder 1, %s12
      %p140 = scmp.lt.s32.totalorder %s12, 3
      %p141 = pnand %p139, %p140
      %p142 = pneg %p141
      // Predicated region
      $region25: #{tpu_custom_call.1} parent=5 // pred_check
        _
      $region26: #{tpu_custom_call.1} parent=5 // pred_check_branch
        %144 = sbr.rel (%p141) target = $region28
      $region27: #{tpu_custom_call.1} parent=5 // pred_region
        %s145 = ssub.s32 %s12, 1
        %s146 = sand.u32 %s25, 1
        %s147 = scalar_lea.sflag [#allocation3], %s146
        %s148 = sand.u32 %s25, 1
        %s149 = smul.addr %s148, 32
        %s150 = scalar_lea.vmem [#allocation2], %s149
        // Predicated region
        $region29: #{tpu_custom_call.1} parent=27 // pred_check
          %p151 = pneg %p38
        $region30: #{tpu_custom_call.1} parent=27 // pred_check_branch
          %153 = sbr.rel (%p151) target = $region32
        $region31: #{tpu_custom_call.1} parent=27 // pred_region
          %154 = dma.done %s147, 512
        $region32: #{tpu_custom_call.1} parent=27 // pred_fallthru
          _
        // Predicated region
        $region33: #{tpu_custom_call.1} parent=27 // pred_check
          %p155 = pneg %p59
        $region34: #{tpu_custom_call.1} parent=27 // pred_check_branch
          %157 = sbr.rel (%p155) target = $region36
        $region35: #{tpu_custom_call.1} parent=27 // pred_region
          %158 = dma.done [#allocation5], 12288
        $region36: #{tpu_custom_call.1} parent=27 // pred_fallthru
          _
        %s159 = sand.u32 %s25, 1
        %s160 = scalar_lea.sflag [#allocation3], %s159
        %s161 = sand.u32 %s25, 1
        %s162 = smul.addr %s161, 32
        %s163 = scalar_lea.vmem [#allocation2], %s162
        %p164 = pneg %p38
        %p165 = pneg %p35
        %p166 = pneg %p59
        %p167 = pneg %p56
        %p168 = pneg %p85
        %p169 = pneg %p82
        %s170 = smul.u32 8, %s17
        %p171 = scmp.lt.s32.totalorder %s170, 15
        %s172 = scalar_select %p171, %s170, 15
        %s173 = smul.addr %s172, 2
        %s174 = smul.addr %s173, 8
        %s175 = scalar_lea.vmem %s2, %s174
        %s176 = smul.u32 2, %s17
        %s177 = smul.u32 8, %s17
        %p178 = scmp.lt.s32.totalorder %s177, 15
        %s179 = scalar_select %p178, %s177, 15
        %s180 = smul.addr %s179, 2
        %s181 = smul.addr %s180, 8
        %s182 = scalar_lea.vmem %s2, %s181
        %s183 = smul.u32 8, %s17
        %v184 = vld [vmem:[%s150] sm:$0xff]
        %v185 = vld [vmem:[%s150 + $0x8] sm:$0xff]
        %v186 = vld [vmem:[%s150 + $0x10] sm:$0xff]
        %v187 = vld [vmem:[%s150 + $0x18] sm:$0xff]
        %v188 = vpack.c.bf16 %v186, %v184
        %v189 = vpack.c.bf16 %v187, %v185
        %v190 = vld [vmem:[#allocation4] sm:$0xff]
        %v191 = vld [vmem:[#allocation4 + $0x8] sm:$0xff]
        %v192 = vld [vmem:[#allocation4 + $0x10] sm:$0xff]
        %v193 = vld [vmem:[#allocation4 + $0x18] sm:$0xff]
        %v194 = vld [vmem:[#allocation4 + $0x20] sm:$0xff]
        %v195 = vld [vmem:[#allocation4 + $0x28] sm:$0xff]
        %v196 = vld [vmem:[#allocation4 + $0x30] sm:$0xff]
        %v197 = vld [vmem:[#allocation4 + $0x38] sm:$0xff]
        %v198 = vld [vmem:[#allocation4 + $0x40] sm:$0xff]
        %v199 = vld [vmem:[#allocation4 + $0x48] sm:$0xff]
        %v200 = vld [vmem:[#allocation4 + $0x50] sm:$0xff]
        %v201 = vld [vmem:[#allocation4 + $0x58] sm:$0xff]
        %v202 = vld [vmem:[#allocation4 + $0x60] sm:$0xff]
        %v203 = vld [vmem:[#allocation4 + $0x68] sm:$0xff]
        %v204 = vld [vmem:[#allocation4 + $0x70] sm:$0xff]
        %v205 = vld [vmem:[#allocation4 + $0x78] sm:$0xff]
        %v206 = vld [vmem:[#allocation4 + $0x80] sm:$0xff]
        %v207 = vld [vmem:[#allocation4 + $0x88] sm:$0xff]
        %v208 = vld [vmem:[#allocation4 + $0x90] sm:$0xff]
        %v209 = vld [vmem:[#allocation4 + $0x98] sm:$0xff]
        %v210 = vld [vmem:[#allocation4 + $0xa0] sm:$0xff]
        %v211 = vld [vmem:[#allocation4 + $0xa8] sm:$0xff]
        %v212 = vld [vmem:[#allocation4 + $0xb0] sm:$0xff]
        %v213 = vld [vmem:[#allocation4 + $0xb8] sm:$0xff]
        %v214 = vld [vmem:[#allocation4 + $0xc0] sm:$0xff]
        %v215 = vld [vmem:[#allocation4 + $0xc8] sm:$0xff]
        %v216 = vld [vmem:[#allocation4 + $0xd0] sm:$0xff]
        %v217 = vld [vmem:[#allocation4 + $0xd8] sm:$0xff]
        %v218 = vld [vmem:[#allocation4 + $0xe0] sm:$0xff]
        %v219 = vld [vmem:[#allocation4 + $0xe8] sm:$0xff]
        %v220 = vld [vmem:[#allocation4 + $0xf0] sm:$0xff]
        %v221 = vld [vmem:[#allocation4 + $0xf8] sm:$0xff]
        %v222 = vld [vmem:[#allocation4 + $0x100] sm:$0xff]
        %v223 = vld [vmem:[#allocation4 + $0x108] sm:$0xff]
        %v224 = vld [vmem:[#allocation4 + $0x110] sm:$0xff]
        %v225 = vld [vmem:[#allocation4 + $0x118] sm:$0xff]
        %v226 = vld [vmem:[#allocation4 + $0x120] sm:$0xff]
        %v227 = vld [vmem:[#allocation4 + $0x128] sm:$0xff]
        %v228 = vld [vmem:[#allocation4 + $0x130] sm:$0xff]
        %v229 = vld [vmem:[#allocation4 + $0x138] sm:$0xff]
        %v230 = vld [vmem:[#allocation4 + $0x140] sm:$0xff]
        %v231 = vld [vmem:[#allocation4 + $0x148] sm:$0xff]
        %v232 = vld [vmem:[#allocation4 + $0x150] sm:$0xff]
        %v233 = vld [vmem:[#allocation4 + $0x158] sm:$0xff]
        %v234 = vld [vmem:[#allocation4 + $0x160] sm:$0xff]
        %v235 = vld [vmem:[#allocation4 + $0x168] sm:$0xff]
        %v236 = vld [vmem:[#allocation4 + $0x170] sm:$0xff]
        %v237 = vld [vmem:[#allocation4 + $0x178] sm:$0xff]
        %v238 = vld [vmem:[#allocation4 + $0x180] sm:$0xff]
        %v239 = vld [vmem:[#allocation4 + $0x188] sm:$0xff]
        %v240 = vld [vmem:[#allocation4 + $0x190] sm:$0xff]
        %v241 = vld [vmem:[#allocation4 + $0x198] sm:$0xff]
        %v242 = vld [vmem:[#allocation4 + $0x1a0] sm:$0xff]
        %v243 = vld [vmem:[#allocation4 + $0x1a8] sm:$0xff]
        %v244 = vld [vmem:[#allocation4 + $0x1b0] sm:$0xff]
        %v245 = vld [vmem:[#allocation4 + $0x1b8] sm:$0xff]
        %v246 = vld [vmem:[#allocation4 + $0x1c0] sm:$0xff]
        %v247 = vld [vmem:[#allocation4 + $0x1c8] sm:$0xff]
        %v248 = vld [vmem:[#allocation4 + $0x1d0] sm:$0xff]
        %v249 = vld [vmem:[#allocation4 + $0x1d8] sm:$0xff]
        %v250 = vld [vmem:[#allocation4 + $0x1e0] sm:$0xff]
        %v251 = vld [vmem:[#allocation4 + $0x1e8] sm:$0xff]
        %v252 = vld [vmem:[#allocation4 + $0x1f0] sm:$0xff]
        %v253 = vld [vmem:[#allocation4 + $0x1f8] sm:$0xff]
        %v254 = vld [vmem:[#allocation4 + $0x200] sm:$0xff]
        %v255 = vld [vmem:[#allocation4 + $0x208] sm:$0xff]
        %v256 = vld [vmem:[#allocation4 + $0x210] sm:$0xff]
        %v257 = vld [vmem:[#allocation4 + $0x218] sm:$0xff]
        %v258 = vld [vmem:[#allocation4 + $0x220] sm:$0xff]
        %v259 = vld [vmem:[#allocation4 + $0x228] sm:$0xff]
        %v260 = vld [vmem:[#allocation4 + $0x230] sm:$0xff]
        %v261 = vld [vmem:[#allocation4 + $0x238] sm:$0xff]
        %v262 = vld [vmem:[#allocation4 + $0x240] sm:$0xff]
        %v263 = vld [vmem:[#allocation4 + $0x248] sm:$0xff]
        %v264 = vld [vmem:[#allocation4 + $0x250] sm:$0xff]
        %v265 = vld [vmem:[#allocation4 + $0x258] sm:$0xff]
        %v266 = vld [vmem:[#allocation4 + $0x260] sm:$0xff]
        %v267 = vld [vmem:[#allocation4 + $0x268] sm:$0xff]
        %v268 = vld [vmem:[#allocation4 + $0x270] sm:$0xff]
        %v269 = vld [vmem:[#allocation4 + $0x278] sm:$0xff]
        %v270 = vld [vmem:[#allocation4 + $0x280] sm:$0xff]
        %v271 = vld [vmem:[#allocation4 + $0x288] sm:$0xff]
        %v272 = vld [vmem:[#allocation4 + $0x290] sm:$0xff]
        %v273 = vld [vmem:[#allocation4 + $0x298] sm:$0xff]
        %v274 = vld [vmem:[#allocation4 + $0x2a0] sm:$0xff]
        %v275 = vld [vmem:[#allocation4 + $0x2a8] sm:$0xff]
        %v276 = vld [vmem:[#allocation4 + $0x2b0] sm:$0xff]
        %v277 = vld [vmem:[#allocation4 + $0x2b8] sm:$0xff]
        %v278 = vld [vmem:[#allocation4 + $0x2c0] sm:$0xff]
        %v279 = vld [vmem:[#allocation4 + $0x2c8] sm:$0xff]
        %v280 = vld [vmem:[#allocation4 + $0x2d0] sm:$0xff]
        %v281 = vld [vmem:[#allocation4 + $0x2d8] sm:$0xff]
        %v282 = vld [vmem:[#allocation4 + $0x2e0] sm:$0xff]
        %v283 = vld [vmem:[#allocation4 + $0x2e8] sm:$0xff]
        %v284 = vld [vmem:[#allocation4 + $0x2f0] sm:$0xff]
        %v285 = vld [vmem:[#allocation4 + $0x2f8] sm:$0xff]
        %v382 = vunpack.c.l.b16 %v190
        %v383 = vunpack.c.h.b16 %v190
        %v384 = vunpack.c.l.b16 %v191
        %v385 = vunpack.c.h.b16 %v191
        %v386 = vunpack.c.l.b16 %v192
        %v387 = vunpack.c.h.b16 %v192
        %v388 = vunpack.c.l.b16 %v193
        %v389 = vunpack.c.h.b16 %v193
        %v390 = vunpack.c.l.b16 %v194
        %v391 = vunpack.c.h.b16 %v194
        %v392 = vunpack.c.l.b16 %v195
        %v393 = vunpack.c.h.b16 %v195
        %v394 = vunpack.c.l.b16 %v196
        %v395 = vunpack.c.h.b16 %v196
        %v396 = vunpack.c.l.b16 %v197
        %v397 = vunpack.c.h.b16 %v197
        %v398 = vunpack.c.l.b16 %v198
        %v399 = vunpack.c.h.b16 %v198
        %v400 = vunpack.c.l.b16 %v199
        %v401 = vunpack.c.h.b16 %v199
        %v402 = vunpack.c.l.b16 %v200
        %v403 = vunpack.c.h.b16 %v200
        %v404 = vunpack.c.l.b16 %v201
        %v405 = vunpack.c.h.b16 %v201
        %v406 = vunpack.c.l.b16 %v202
        %v407 = vunpack.c.h.b16 %v202
        %v408 = vunpack.c.l.b16 %v203
        %v409 = vunpack.c.h.b16 %v203
        %v410 = vunpack.c.l.b16 %v204
        %v411 = vunpack.c.h.b16 %v204
        %v412 = vunpack.c.l.b16 %v205
        %v413 = vunpack.c.h.b16 %v205
        %v414 = vunpack.c.l.b16 %v206
        %v415 = vunpack.c.h.b16 %v206
        %v416 = vunpack.c.l.b16 %v207
        %v417 = vunpack.c.h.b16 %v207
        %v418 = vunpack.c.l.b16 %v208
        %v419 = vunpack.c.h.b16 %v208
        %v420 = vunpack.c.l.b16 %v209
        %v421 = vunpack.c.h.b16 %v209
        %v422 = vunpack.c.l.b16 %v210
        %v423 = vunpack.c.h.b16 %v210
        %v424 = vunpack.c.l.b16 %v211
        %v425 = vunpack.c.h.b16 %v211
        %v426 = vunpack.c.l.b16 %v212
        %v427 = vunpack.c.h.b16 %v212
        %v428 = vunpack.c.l.b16 %v213
        %v429 = vunpack.c.h.b16 %v213
        %v430 = vunpack.c.l.b16 %v214
        %v431 = vunpack.c.h.b16 %v214
        %v432 = vunpack.c.l.b16 %v215
        %v433 = vunpack.c.h.b16 %v215
        %v434 = vunpack.c.l.b16 %v216
        %v435 = vunpack.c.h.b16 %v216
        %v436 = vunpack.c.l.b16 %v217
        %v437 = vunpack.c.h.b16 %v217
        %v438 = vunpack.c.l.b16 %v218
        %v439 = vunpack.c.h.b16 %v218
        %v440 = vunpack.c.l.b16 %v219
        %v441 = vunpack.c.h.b16 %v219
        %v442 = vunpack.c.l.b16 %v220
        %v443 = vunpack.c.h.b16 %v220
        %v444 = vunpack.c.l.b16 %v221
        %v445 = vunpack.c.h.b16 %v221
        %v446 = vunpack.c.l.b16 %v222
        %v447 = vunpack.c.h.b16 %v222
        %v448 = vunpack.c.l.b16 %v223
        %v449 = vunpack.c.h.b16 %v223
        %v450 = vunpack.c.l.b16 %v224
        %v451 = vunpack.c.h.b16 %v224
        %v452 = vunpack.c.l.b16 %v225
        %v453 = vunpack.c.h.b16 %v225
        %v454 = vunpack.c.l.b16 %v226
        %v455 = vunpack.c.h.b16 %v226
        %v456 = vunpack.c.l.b16 %v227
        %v457 = vunpack.c.h.b16 %v227
        %v458 = vunpack.c.l.b16 %v228
        %v459 = vunpack.c.h.b16 %v228
        %v460 = vunpack.c.l.b16 %v229
        %v461 = vunpack.c.h.b16 %v229
        %v462 = vunpack.c.l.b16 %v230
        %v463 = vunpack.c.h.b16 %v230
        %v464 = vunpack.c.l.b16 %v231
        %v465 = vunpack.c.h.b16 %v231
        %v466 = vunpack.c.l.b16 %v232
        %v467 = vunpack.c.h.b16 %v232
        %v468 = vunpack.c.l.b16 %v233
        %v469 = vunpack.c.h.b16 %v233
        %v470 = vunpack.c.l.b16 %v234
        %v471 = vunpack.c.h.b16 %v234
        %v472 = vunpack.c.l.b16 %v235
        %v473 = vunpack.c.h.b16 %v235
        %v474 = vunpack.c.l.b16 %v236
        %v475 = vunpack.c.h.b16 %v236
        %v476 = vunpack.c.l.b16 %v237
        %v477 = vunpack.c.h.b16 %v237
        %v478 = vunpack.c.l.b16 %v238
        %v479 = vunpack.c.h.b16 %v238
        %v480 = vunpack.c.l.b16 %v239
        %v481 = vunpack.c.h.b16 %v239
        %v482 = vunpack.c.l.b16 %v240
        %v483 = vunpack.c.h.b16 %v240
        %v484 = vunpack.c.l.b16 %v241
        %v485 = vunpack.c.h.b16 %v241
        %v486 = vunpack.c.l.b16 %v242
        %v487 = vunpack.c.h.b16 %v242
        %v488 = vunpack.c.l.b16 %v243
        %v489 = vunpack.c.h.b16 %v243
        %v490 = vunpack.c.l.b16 %v244
        %v491 = vunpack.c.h.b16 %v244
        %v492 = vunpack.c.l.b16 %v245
        %v493 = vunpack.c.h.b16 %v245
        %v494 = vunpack.c.l.b16 %v246
        %v495 = vunpack.c.h.b16 %v246
        %v496 = vunpack.c.l.b16 %v247
        %v497 = vunpack.c.h.b16 %v247
        %v498 = vunpack.c.l.b16 %v248
        %v499 = vunpack.c.h.b16 %v248
        %v500 = vunpack.c.l.b16 %v249
        %v501 = vunpack.c.h.b16 %v249
        %v502 = vunpack.c.l.b16 %v250
        %v503 = vunpack.c.h.b16 %v250
        %v504 = vunpack.c.l.b16 %v251
        %v505 = vunpack.c.h.b16 %v251
        %v506 = vunpack.c.l.b16 %v252
        %v507 = vunpack.c.h.b16 %v252
        %v508 = vunpack.c.l.b16 %v253
        %v509 = vunpack.c.h.b16 %v253
        %v510 = vunpack.c.l.b16 %v254
        %v511 = vunpack.c.h.b16 %v254
        %v512 = vunpack.c.l.b16 %v255
        %v513 = vunpack.c.h.b16 %v255
        %v514 = vunpack.c.l.b16 %v256
        %v515 = vunpack.c.h.b16 %v256
        %v516 = vunpack.c.l.b16 %v257
        %v517 = vunpack.c.h.b16 %v257
        %v518 = vunpack.c.l.b16 %v258
        %v519 = vunpack.c.h.b16 %v258
        %v520 = vunpack.c.l.b16 %v259
        %v521 = vunpack.c.h.b16 %v259
        %v522 = vunpack.c.l.b16 %v260
        %v523 = vunpack.c.h.b16 %v260
        %v524 = vunpack.c.l.b16 %v261
        %v525 = vunpack.c.h.b16 %v261
        %v526 = vunpack.c.l.b16 %v262
        %v527 = vunpack.c.h.b16 %v262
        %v528 = vunpack.c.l.b16 %v263
        %v529 = vunpack.c.h.b16 %v263
        %v530 = vunpack.c.l.b16 %v264
        %v531 = vunpack.c.h.b16 %v264
        %v532 = vunpack.c.l.b16 %v265
        %v533 = vunpack.c.h.b16 %v265
        %v534 = vunpack.c.l.b16 %v266
        %v535 = vunpack.c.h.b16 %v266
        %v536 = vunpack.c.l.b16 %v267
        %v537 = vunpack.c.h.b16 %v267
        %v538 = vunpack.c.l.b16 %v268
        %v539 = vunpack.c.h.b16 %v268
        %v540 = vunpack.c.l.b16 %v269
        %v541 = vunpack.c.h.b16 %v269
        %v542 = vunpack.c.l.b16 %v270
        %v543 = vunpack.c.h.b16 %v270
        %v544 = vunpack.c.l.b16 %v271
        %v545 = vunpack.c.h.b16 %v271
        %v546 = vunpack.c.l.b16 %v272
        %v547 = vunpack.c.h.b16 %v272
        %v548 = vunpack.c.l.b16 %v273
        %v549 = vunpack.c.h.b16 %v273
        %v550 = vunpack.c.l.b16 %v274
        %v551 = vunpack.c.h.b16 %v274
        %v552 = vunpack.c.l.b16 %v275
        %v553 = vunpack.c.h.b16 %v275
        %v554 = vunpack.c.l.b16 %v276
        %v555 = vunpack.c.h.b16 %v276
        %v556 = vunpack.c.l.b16 %v277
        %v557 = vunpack.c.h.b16 %v277
        %v558 = vunpack.c.l.b16 %v278
        %v559 = vunpack.c.h.b16 %v278
        %v560 = vunpack.c.l.b16 %v279
        %v561 = vunpack.c.h.b16 %v279
        %v562 = vunpack.c.l.b16 %v280
        %v563 = vunpack.c.h.b16 %v280
        %v564 = vunpack.c.l.b16 %v281
        %v565 = vunpack.c.h.b16 %v281
        %v566 = vunpack.c.l.b16 %v282
        %v567 = vunpack.c.h.b16 %v282
        %v568 = vunpack.c.l.b16 %v283
        %v569 = vunpack.c.h.b16 %v283
        %v570 = vunpack.c.l.b16 %v284
        %v571 = vunpack.c.h.b16 %v284
        %v572 = vunpack.c.l.b16 %v285
        %v573 = vunpack.c.h.b16 %v285
        %v574 = vpack.c.b16 %v388, %v382
        %v575 = vpack.c.b16 %v389, %v383
        %v576 = vpack.c.b16 %v390, %v384
        %v577 = vpack.c.b16 %v391, %v385
        %v578 = vpack.c.b16 %v392, %v386
        %v579 = vpack.c.b16 %v393, %v387
        %v580 = vpack.c.b16 %v400, %v394
        %v581 = vpack.c.b16 %v401, %v395
        %v582 = vpack.c.b16 %v402, %v396
        %v583 = vpack.c.b16 %v403, %v397
        %v584 = vpack.c.b16 %v404, %v398
        %v585 = vpack.c.b16 %v405, %v399
        %v586 = vpack.c.b16 %v412, %v406
        %v587 = vpack.c.b16 %v413, %v407
        %v588 = vpack.c.b16 %v414, %v408
        %v589 = vpack.c.b16 %v415, %v409
        %v590 = vpack.c.b16 %v416, %v410
        %v591 = vpack.c.b16 %v417, %v411
        %v592 = vpack.c.b16 %v424, %v418
        %v593 = vpack.c.b16 %v425, %v419
        %v594 = vpack.c.b16 %v426, %v420
        %v595 = vpack.c.b16 %v427, %v421
        %v596 = vpack.c.b16 %v428, %v422
        %v597 = vpack.c.b16 %v429, %v423
        %v598 = vpack.c.b16 %v436, %v430
        %v599 = vpack.c.b16 %v437, %v431
        %v600 = vpack.c.b16 %v438, %v432
        %v601 = vpack.c.b16 %v439, %v433
        %v602 = vpack.c.b16 %v440, %v434
        %v603 = vpack.c.b16 %v441, %v435
        %v604 = vpack.c.b16 %v448, %v442
        %v605 = vpack.c.b16 %v449, %v443
        %v606 = vpack.c.b16 %v450, %v444
        %v607 = vpack.c.b16 %v451, %v445
        %v608 = vpack.c.b16 %v452, %v446
        %v609 = vpack.c.b16 %v453, %v447
        %v610 = vpack.c.b16 %v460, %v454
        %v611 = vpack.c.b16 %v461, %v455
        %v612 = vpack.c.b16 %v462, %v456
        %v613 = vpack.c.b16 %v463, %v457
        %v614 = vpack.c.b16 %v464, %v458
        %v615 = vpack.c.b16 %v465, %v459
        %v616 = vpack.c.b16 %v472, %v466
        %v617 = vpack.c.b16 %v473, %v467
        %v618 = vpack.c.b16 %v474, %v468
        %v619 = vpack.c.b16 %v475, %v469
        %v620 = vpack.c.b16 %v476, %v470
        %v621 = vpack.c.b16 %v477, %v471
        %v622 = vpack.c.b16 %v484, %v478
        %v623 = vpack.c.b16 %v485, %v479
        %v624 = vpack.c.b16 %v486, %v480
        %v625 = vpack.c.b16 %v487, %v481
        %v626 = vpack.c.b16 %v488, %v482
        %v627 = vpack.c.b16 %v489, %v483
        %v628 = vpack.c.b16 %v496, %v490
        %v629 = vpack.c.b16 %v497, %v491
        %v630 = vpack.c.b16 %v498, %v492
        %v631 = vpack.c.b16 %v499, %v493
        %v632 = vpack.c.b16 %v500, %v494
        %v633 = vpack.c.b16 %v501, %v495
        %v634 = vpack.c.b16 %v508, %v502
        %v635 = vpack.c.b16 %v509, %v503
        %v636 = vpack.c.b16 %v510, %v504
        %v637 = vpack.c.b16 %v511, %v505
        %v638 = vpack.c.b16 %v512, %v506
        %v639 = vpack.c.b16 %v513, %v507
        %v640 = vpack.c.b16 %v520, %v514
        %v641 = vpack.c.b16 %v521, %v515
        %v642 = vpack.c.b16 %v522, %v516
        %v643 = vpack.c.b16 %v523, %v517
        %v644 = vpack.c.b16 %v524, %v518
        %v645 = vpack.c.b16 %v525, %v519
        %v646 = vpack.c.b16 %v532, %v526
        %v647 = vpack.c.b16 %v533, %v527
        %v648 = vpack.c.b16 %v534, %v528
        %v649 = vpack.c.b16 %v535, %v529
        %v650 = vpack.c.b16 %v536, %v530
        %v651 = vpack.c.b16 %v537, %v531
        %v652 = vpack.c.b16 %v544, %v538
        %v653 = vpack.c.b16 %v545, %v539
        %v654 = vpack.c.b16 %v546, %v540
        %v655 = vpack.c.b16 %v547, %v541
        %v656 = vpack.c.b16 %v548, %v542
        %v657 = vpack.c.b16 %v549, %v543
        %v658 = vpack.c.b16 %v556, %v550
        %v659 = vpack.c.b16 %v557, %v551
        %v660 = vpack.c.b16 %v558, %v552
        %v661 = vpack.c.b16 %v559, %v553
        %v662 = vpack.c.b16 %v560, %v554
        %v663 = vpack.c.b16 %v561, %v555
        %v664 = vpack.c.b16 %v568, %v562
        %v665 = vpack.c.b16 %v569, %v563
        %v666 = vpack.c.b16 %v570, %v564
        %v667 = vpack.c.b16 %v571, %v565
        %v668 = vpack.c.b16 %v572, %v566
        %v669 = vpack.c.b16 %v573, %v567
        %766 = vmatprep.subr.bf16.mxu0 %v575
        %767 = vmatpush1.bf16.msra.mxu0 %v574
        %768 = vmatprep.subr.bf16.mxu0 %v581
        %769 = vmatpush1.bf16.msra.mxu0 %v580
        %770 = vmatprep.subr.bf16.mxu0 %v587
        %771 = vmatpush1.bf16.msra.mxu0 %v586
        %772 = vmatprep.subr.bf16.mxu0 %v593
        %773 = vmatpush1.bf16.msra.mxu0 %v592
        %774 = vmatprep.subr.bf16.mxu0 %v599
        %775 = vmatpush1.bf16.msra.mxu0 %v598
        %776 = vmatprep.subr.bf16.mxu0 %v605
        %777 = vmatpush1.bf16.msra.mxu0 %v604
        %778 = vmatprep.subr.bf16.mxu0 %v611
        %779 = vmatpush1.bf16.msra.mxu0 %v610
        %780 = vmatprep.subr.bf16.mxu0 %v617
        %781 = vmatpush1.bf16.msra.mxu0 %v616
        %782 = vmatprep.subr.bf16.mxu0 %v623
        %783 = vmatpush1.bf16.msra.mxu0 %v622
        %784 = vmatprep.subr.bf16.mxu0 %v629
        %785 = vmatpush1.bf16.msra.mxu0 %v628
        %786 = vmatprep.subr.bf16.mxu0 %v635
        %787 = vmatpush1.bf16.msra.mxu0 %v634
        %788 = vmatprep.subr.bf16.mxu0 %v641
        %789 = vmatpush1.bf16.msra.mxu0 %v640
        %790 = vmatprep.subr.bf16.mxu0 %v647
        %791 = vmatpush1.bf16.msra.mxu0 %v646
        %792 = vmatprep.subr.bf16.mxu0 %v653
        %793 = vmatpush1.bf16.msra.mxu0 %v652
        %794 = vmatprep.subr.bf16.mxu0 %v659
        %795 = vmatpush1.bf16.msra.mxu0 %v658
        %796 = vmatprep.subr.bf16.mxu0 %v665
        %797 = vmatpush1.bf16.msra.mxu0 %v664
        %798 = vmatprep.mubr.bf16.mxu0 %v189
        %799 = vmatmul.mubr.bf16.gmra.mrb[0].mxu0 %v188
        %v800 = vpop.f32.mrb[0].mxu0
        %v801 = vadd.f32 0.0, %v800
        %v802 = vpop.f32.mrb[0].mxu0
        %v803 = vadd.f32 0.0, %v802
        %v804 = vpop.f32.mrb[0].mxu0
        %v805 = vadd.f32 0.0, %v804
        %v806 = vpop.f32.mrb[0].mxu0
        %v807 = vadd.f32 0.0, %v806
        %808 = vdwg.mxu0
        %809 = vmatprep.subr.bf16.mxu0 %v577
        %810 = vmatpush1.bf16.msra.mxu0 %v576
        %811 = vmatprep.subr.bf16.mxu0 %v583
        %812 = vmatpush1.bf16.msra.mxu0 %v582
        %813 = vmatprep.subr.bf16.mxu0 %v589
        %814 = vmatpush1.bf16.msra.mxu0 %v588
        %815 = vmatprep.subr.bf16.mxu0 %v595
        %816 = vmatpush1.bf16.msra.mxu0 %v594
        %817 = vmatprep.subr.bf16.mxu0 %v601
        %818 = vmatpush1.bf16.msra.mxu0 %v600
        %819 = vmatprep.subr.bf16.mxu0 %v607
        %820 = vmatpush1.bf16.msra.mxu0 %v606
        %821 = vmatprep.subr.bf16.mxu0 %v613
        %822 = vmatpush1.bf16.msra.mxu0 %v612
        %823 = vmatprep.subr.bf16.mxu0 %v619
        %824 = vmatpush1.bf16.msra.mxu0 %v618
        %825 = vmatprep.subr.bf16.mxu0 %v625
        %826 = vmatpush1.bf16.msra.mxu0 %v624
        %827 = vmatprep.subr.bf16.mxu0 %v631
        %828 = vmatpush1.bf16.msra.mxu0 %v630
        %829 = vmatprep.subr.bf16.mxu0 %v637
        %830 = vmatpush1.bf16.msra.mxu0 %v636
        %831 = vmatprep.subr.bf16.mxu0 %v643
        %832 = vmatpush1.bf16.msra.mxu0 %v642
        %833 = vmatprep.subr.bf16.mxu0 %v649
        %834 = vmatpush1.bf16.msra.mxu0 %v648
        %835 = vmatprep.subr.bf16.mxu0 %v655
        %836 = vmatpush1.bf16.msra.mxu0 %v654
        %837 = vmatprep.subr.bf16.mxu0 %v661
        %838 = vmatpush1.bf16.msra.mxu0 %v660
        %839 = vmatprep.subr.bf16.mxu0 %v667
        %840 = vmatpush1.bf16.msra.mxu0 %v666
        %841 = vmatprep.mubr.bf16.mxu0 %v189
        %842 = vmatmul.mubr.bf16.gmra.mrb[0].mxu0 %v188
        %v843 = vpop.f32.mrb[0].mxu0
        %v844 = vadd.f32 0.0, %v843
        %v845 = vpop.f32.mrb[0].mxu0
        %v846 = vadd.f32 0.0, %v845
        %v847 = vpop.f32.mrb[0].mxu0
        %v848 = vadd.f32 0.0, %v847
        %v849 = vpop.f32.mrb[0].mxu0
        %v850 = vadd.f32 0.0, %v849
        %851 = vdwg.mxu0
        %852 = vmatprep.subr.bf16.mxu0 %v579
        %853 = vmatpush1.bf16.msra.mxu0 %v578
        %854 = vmatprep.subr.bf16.mxu0 %v585
        %855 = vmatpush1.bf16.msra.mxu0 %v584
        %856 = vmatprep.subr.bf16.mxu0 %v591
        %857 = vmatpush1.bf16.msra.mxu0 %v590
        %858 = vmatprep.subr.bf16.mxu0 %v597
        %859 = vmatpush1.bf16.msra.mxu0 %v596
        %860 = vmatprep.subr.bf16.mxu0 %v603
        %861 = vmatpush1.bf16.msra.mxu0 %v602
        %862 = vmatprep.subr.bf16.mxu0 %v609
        %863 = vmatpush1.bf16.msra.mxu0 %v608
        %864 = vmatprep.subr.bf16.mxu0 %v615
        %865 = vmatpush1.bf16.msra.mxu0 %v614
        %866 = vmatprep.subr.bf16.mxu0 %v621
        %867 = vmatpush1.bf16.msra.mxu0 %v620
        %868 = vmatprep.subr.bf16.mxu0 %v627
        %869 = vmatpush1.bf16.msra.mxu0 %v626
        %870 = vmatprep.subr.bf16.mxu0 %v633
        %871 = vmatpush1.bf16.msra.mxu0 %v632
        %872 = vmatprep.subr.bf16.mxu0 %v639
        %873 = vmatpush1.bf16.msra.mxu0 %v638
        %874 = vmatprep.subr.bf16.mxu0 %v645
        %875 = vmatpush1.bf16.msra.mxu0 %v644
        %876 = vmatprep.subr.bf16.mxu0 %v651
        %877 = vmatpush1.bf16.msra.mxu0 %v650
        %878 = vmatprep.subr.bf16.mxu0 %v657
        %879 = vmatpush1.bf16.msra.mxu0 %v656
        %880 = vmatprep.subr.bf16.mxu0 %v663
        %881 = vmatpush1.bf16.msra.mxu0 %v662
        %882 = vmatprep.subr.bf16.mxu0 %v669
        %883 = vmatpush1.bf16.msra.mxu0 %v668
        %884 = vmatprep.mubr.bf16.mxu0 %v189
        %885 = vmatmul.mubr.bf16.gmra.mrb[0].mxu0 %v188
        %v886 = vpop.f32.mrb[0].mxu0
        %v887 = vadd.f32 0.0, %v886
        %v888 = vpop.f32.mrb[0].mxu0
        %v889 = vadd.f32 0.0, %v888
        %v890 = vpop.f32.mrb[0].mxu0
        %v891 = vadd.f32 0.0, %v890
        %v892 = vpop.f32.mrb[0].mxu0
        %v893 = vadd.f32 0.0, %v892
        %894 = vdwg.mxu0
        %897 = vrot.lane.b32.xlu0 %v801, 80
        %v898 = vpop.permute.xlu0 %897
        %899 = vrot.lane.b32.xlu0 %v805, 80
        %v900 = vpop.permute.xlu0 %899
        %905 = vrot.lane.b32.xlu0 %v801, 32
        %v906 = vpop.permute.xlu0 %905
        %907 = vrot.lane.b32.xlu0 %v803, 32
        %v908 = vpop.permute.xlu0 %907
        %909 = vrot.lane.b32.xlu0 %v805, 32
        %v910 = vpop.permute.xlu0 %909
        %911 = vrot.lane.b32.xlu0 %v807, 32
        %v912 = vpop.permute.xlu0 %911
        %vm913 = vcmask 261120
        %v914 = vsel %vm913, %v906, %v908
        %v915 = vsel %vm913, %v910, %v912
        %918 = vrot.lane.b32.xlu0 %v803, 112
        %v919 = vpop.permute.xlu0 %918
        %920 = vrot.lane.b32.xlu0 %v807, 112
        %v921 = vpop.permute.xlu0 %920
        %924 = vrot.lane.b32.xlu0 %v803, 64
        %v925 = vpop.permute.xlu0 %924
        %926 = vrot.lane.b32.xlu0 %v807, 64
        %v927 = vpop.permute.xlu0 %926
        %932 = vrot.lane.b32.xlu0 %v803, 16
        %v933 = vpop.permute.xlu0 %932
        %934 = vrot.lane.b32.xlu0 %v844, 16
        %v935 = vpop.permute.xlu0 %934
        %936 = vrot.lane.b32.xlu0 %v807, 16
        %v937 = vpop.permute.xlu0 %936
        %938 = vrot.lane.b32.xlu0 %v848, 16
        %v939 = vpop.permute.xlu0 %938
        %vm940 = vcmask 130048
        %v941 = vsel %vm940, %v933, %v935
        %v942 = vsel %vm940, %v937, %v939
        %945 = vrot.lane.b32.xlu0 %v844, 96
        %v946 = vpop.permute.xlu0 %945
        %947 = vrot.lane.b32.xlu0 %v848, 96
        %v948 = vpop.permute.xlu0 %947
        %951 = vrot.lane.b32.xlu0 %v844, 48
        %v952 = vpop.permute.xlu0 %951
        %953 = vrot.lane.b32.xlu0 %v848, 48
        %v954 = vpop.permute.xlu0 %953
        %959 = vrot.lane.b32.xlu0 %v846, 80
        %v960 = vpop.permute.xlu0 %959
        %961 = vrot.lane.b32.xlu0 %v850, 80
        %v962 = vpop.permute.xlu0 %961
        %967 = vrot.lane.b32.xlu0 %v846, 32
        %v968 = vpop.permute.xlu0 %967
        %969 = vrot.lane.b32.xlu0 %v887, 32
        %v970 = vpop.permute.xlu0 %969
        %971 = vrot.lane.b32.xlu0 %v850, 32
        %v972 = vpop.permute.xlu0 %971
        %973 = vrot.lane.b32.xlu0 %v891, 32
        %v974 = vpop.permute.xlu0 %973
        %v975 = vsel %vm913, %v968, %v970
        %v976 = vsel %vm913, %v972, %v974
        %979 = vrot.lane.b32.xlu0 %v887, 112
        %v980 = vpop.permute.xlu0 %979
        %981 = vrot.lane.b32.xlu0 %v891, 112
        %v982 = vpop.permute.xlu0 %981
        %985 = vrot.lane.b32.xlu0 %v887, 64
        %v986 = vpop.permute.xlu0 %985
        %987 = vrot.lane.b32.xlu0 %v891, 64
        %v988 = vpop.permute.xlu0 %987
        %993 = vrot.lane.b32.xlu0 %v887, 16
        %v994 = vpop.permute.xlu0 %993
        %995 = vrot.lane.b32.xlu0 %v889, 16
        %v996 = vpop.permute.xlu0 %995
        %997 = vrot.lane.b32.xlu0 %v891, 16
        %v998 = vpop.permute.xlu0 %997
        %999 = vrot.lane.b32.xlu0 %v893, 16
        %v1000 = vpop.permute.xlu0 %999
        %v1001 = vsel %vm940, %v994, %v996
        %v1002 = vsel %vm940, %v998, %v1000
        %1005 = vrot.lane.b32.xlu0 %v889, 96
        %v1006 = vpop.permute.xlu0 %1005
        %1007 = vrot.lane.b32.xlu0 %v893, 96
        %v1008 = vpop.permute.xlu0 %1007
        %1011 = vrot.lane.b32.xlu0 %v889, 48
        %v1012 = vpop.permute.xlu0 %1011
        %1013 = vrot.lane.b32.xlu0 %v893, 48
        %v1014 = vpop.permute.xlu0 %1013
        %v1017 = vcombine.low %v801, %v914
        %v1018 = vcombine.high %v801, %v914
        %v1020 = vunpack.c.l.s4 1983009808
        %v1021 = vunpack.c.0.s8 %v1020
        %v1022 = vlaneseq
        %v1023 = vshrl.u32 %v1022, 7
        %v1024 = vsub.s32 %v1021, %v1023
        %v1025 = vrot.slane %v1017, %v1024
        %v1027 = vunpack.c.l.s4 1983009808
        %v1028 = vunpack.c.0.s8 %v1027
        %v1029 = vlaneseq
        %v1030 = vshrl.u32 %v1029, 7
        %v1031 = vsub.s32 %v1028, %v1030
        %v1032 = vrot.slane %v1018, %v1031
        %v1033 = vcombine.low %v898, %v919
        %v1034 = vcombine.high %v898, %v919
        %v1036 = vunpack.c.l.s4 1983009808
        %v1037 = vunpack.c.0.s8 %v1036
        %v1038 = vlaneseq
        %v1039 = vshrl.u32 %v1038, 7
        %v1040 = vsub.s32 %v1037, %v1039
        %v1041 = vrot.slane %v1033, %v1040
        %v1043 = vunpack.c.l.s4 1983009808
        %v1044 = vunpack.c.0.s8 %v1043
        %v1045 = vlaneseq
        %v1046 = vshrl.u32 %v1045, 7
        %v1047 = vsub.s32 %v1044, %v1046
        %v1048 = vrot.slane %v1034, %v1047
        %v1049 = vcombine.low %v925, %v946
        %v1050 = vcombine.high %v925, %v946
        %v1052 = vunpack.c.l.s4 1983009808
        %v1053 = vunpack.c.0.s8 %v1052
        %v1054 = vlaneseq
        %v1055 = vshrl.u32 %v1054, 7
        %v1056 = vsub.s32 %v1053, %v1055
        %v1057 = vrot.slane %v1049, %v1056
        %v1059 = vunpack.c.l.s4 1983009808
        %v1060 = vunpack.c.0.s8 %v1059
        %v1061 = vlaneseq
        %v1062 = vshrl.u32 %v1061, 7
        %v1063 = vsub.s32 %v1060, %v1062
        %v1064 = vrot.slane %v1050, %v1063
        %v1065 = vcombine.low %v941, %v952
        %v1066 = vcombine.high %v941, %v952
        %v1068 = vunpack.c.l.s4 1983009808
        %v1069 = vunpack.c.0.s8 %v1068
        %v1070 = vlaneseq
        %v1071 = vshrl.u32 %v1070, 7
        %v1072 = vsub.s32 %v1069, %v1071
        %v1073 = vrot.slane %v1065, %v1072
        %v1075 = vunpack.c.l.s4 1983009808
        %v1076 = vunpack.c.0.s8 %v1075
        %v1077 = vlaneseq
        %v1078 = vshrl.u32 %v1077, 7
        %v1079 = vsub.s32 %v1076, %v1078
        %v1080 = vrot.slane %v1066, %v1079
        %v1081 = vcombine.low %v1025, %v1041
        %v1082 = vcombine.high %v1025, %v1041
        %v1084 = vunpack.c.l.s4 1934713408
        %v1085 = vunpack.c.0.s8 %v1084
        %v1086 = vlaneseq
        %v1087 = vshrl.u32 %v1086, 7
        %v1088 = vsub.s32 %v1085, %v1087
        %v1089 = vrot.slane %v1081, %v1088
        %v1091 = vunpack.c.l.s4 1934713408
        %v1092 = vunpack.c.0.s8 %v1091
        %v1093 = vlaneseq
        %v1094 = vshrl.u32 %v1093, 7
        %v1095 = vsub.s32 %v1092, %v1094
        %v1096 = vrot.slane %v1082, %v1095
        %v1097 = vcombine.low %v1032, %v1048
        %v1098 = vcombine.high %v1032, %v1048
        %v1100 = vunpack.c.l.s4 1934713408
        %v1101 = vunpack.c.0.s8 %v1100
        %v1102 = vlaneseq
        %v1103 = vshrl.u32 %v1102, 7
        %v1104 = vsub.s32 %v1101, %v1103
        %v1105 = vrot.slane %v1097, %v1104
        %v1107 = vunpack.c.l.s4 1934713408
        %v1108 = vunpack.c.0.s8 %v1107
        %v1109 = vlaneseq
        %v1110 = vshrl.u32 %v1109, 7
        %v1111 = vsub.s32 %v1108, %v1110
        %v1112 = vrot.slane %v1098, %v1111
        %v1113 = vcombine.low %v1057, %v1073
        %v1114 = vcombine.high %v1057, %v1073
        %v1116 = vunpack.c.l.s4 1934713408
        %v1117 = vunpack.c.0.s8 %v1116
        %v1118 = vlaneseq
        %v1119 = vshrl.u32 %v1118, 7
        %v1120 = vsub.s32 %v1117, %v1119
        %v1121 = vrot.slane %v1113, %v1120
        %v1123 = vunpack.c.l.s4 1934713408
        %v1124 = vunpack.c.0.s8 %v1123
        %v1125 = vlaneseq
        %v1126 = vshrl.u32 %v1125, 7
        %v1127 = vsub.s32 %v1124, %v1126
        %v1128 = vrot.slane %v1114, %v1127
        %v1129 = vcombine.low %v1064, %v1080
        %v1130 = vcombine.high %v1064, %v1080
        %v1132 = vunpack.c.l.s4 1934713408
        %v1133 = vunpack.c.0.s8 %v1132
        %v1134 = vlaneseq
        %v1135 = vshrl.u32 %v1134, 7
        %v1136 = vsub.s32 %v1133, %v1135
        %v1137 = vrot.slane %v1129, %v1136
        %v1139 = vunpack.c.l.s4 1934713408
        %v1140 = vunpack.c.0.s8 %v1139
        %v1141 = vlaneseq
        %v1142 = vshrl.u32 %v1141, 7
        %v1143 = vsub.s32 %v1140, %v1142
        %v1144 = vrot.slane %v1130, %v1143
        %v1145 = vcombine.low %v1089, %v1121
        %v1146 = vcombine.high %v1089, %v1121
        %v1147 = vcombine.low %v1096, %v1128
        %v1148 = vcombine.high %v1096, %v1128
        %v1149 = vcombine.low %v1105, %v1137
        %v1150 = vcombine.high %v1105, %v1137
        %v1151 = vcombine.low %v1112, %v1144
        %v1152 = vcombine.high %v1112, %v1144
        %v1153 = vcombine.low %v846, %v975
        %v1154 = vcombine.high %v846, %v975
        %v1156 = vunpack.c.l.s4 1983009808
        %v1157 = vunpack.c.0.s8 %v1156
        %v1158 = vlaneseq
        %v1159 = vshrl.u32 %v1158, 7
        %v1160 = vsub.s32 %v1157, %v1159
        %v1161 = vrot.slane %v1153, %v1160
        %v1163 = vunpack.c.l.s4 1983009808
        %v1164 = vunpack.c.0.s8 %v1163
        %v1165 = vlaneseq
        %v1166 = vshrl.u32 %v1165, 7
        %v1167 = vsub.s32 %v1164, %v1166
        %v1168 = vrot.slane %v1154, %v1167
        %v1169 = vcombine.low %v960, %v980
        %v1170 = vcombine.high %v960, %v980
        %v1172 = vunpack.c.l.s4 1983009808
        %v1173 = vunpack.c.0.s8 %v1172
        %v1174 = vlaneseq
        %v1175 = vshrl.u32 %v1174, 7
        %v1176 = vsub.s32 %v1173, %v1175
        %v1177 = vrot.slane %v1169, %v1176
        %v1179 = vunpack.c.l.s4 1983009808
        %v1180 = vunpack.c.0.s8 %v1179
        %v1181 = vlaneseq
        %v1182 = vshrl.u32 %v1181, 7
        %v1183 = vsub.s32 %v1180, %v1182
        %v1184 = vrot.slane %v1170, %v1183
        %v1185 = vcombine.low %v986, %v1006
        %v1186 = vcombine.high %v986, %v1006
        %v1188 = vunpack.c.l.s4 1983009808
        %v1189 = vunpack.c.0.s8 %v1188
        %v1190 = vlaneseq
        %v1191 = vshrl.u32 %v1190, 7
        %v1192 = vsub.s32 %v1189, %v1191
        %v1193 = vrot.slane %v1185, %v1192
        %v1195 = vunpack.c.l.s4 1983009808
        %v1196 = vunpack.c.0.s8 %v1195
        %v1197 = vlaneseq
        %v1198 = vshrl.u32 %v1197, 7
        %v1199 = vsub.s32 %v1196, %v1198
        %v1200 = vrot.slane %v1186, %v1199
        %v1201 = vcombine.low %v1001, %v1012
        %v1202 = vcombine.high %v1001, %v1012
        %v1204 = vunpack.c.l.s4 1983009808
        %v1205 = vunpack.c.0.s8 %v1204
        %v1206 = vlaneseq
        %v1207 = vshrl.u32 %v1206, 7
        %v1208 = vsub.s32 %v1205, %v1207
        %v1209 = vrot.slane %v1201, %v1208
        %v1211 = vunpack.c.l.s4 1983009808
        %v1212 = vunpack.c.0.s8 %v1211
        %v1213 = vlaneseq
        %v1214 = vshrl.u32 %v1213, 7
        %v1215 = vsub.s32 %v1212, %v1214
        %v1216 = vrot.slane %v1202, %v1215
        %v1217 = vcombine.low %v1161, %v1177
        %v1218 = vcombine.high %v1161, %v1177
        %v1220 = vunpack.c.l.s4 1934713408
        %v1221 = vunpack.c.0.s8 %v1220
        %v1222 = vlaneseq
        %v1223 = vshrl.u32 %v1222, 7
        %v1224 = vsub.s32 %v1221, %v1223
        %v1225 = vrot.slane %v1217, %v1224
        %v1227 = vunpack.c.l.s4 1934713408
        %v1228 = vunpack.c.0.s8 %v1227
        %v1229 = vlaneseq
        %v1230 = vshrl.u32 %v1229, 7
        %v1231 = vsub.s32 %v1228, %v1230
        %v1232 = vrot.slane %v1218, %v1231
        %v1233 = vcombine.low %v1168, %v1184
        %v1234 = vcombine.high %v1168, %v1184
        %v1236 = vunpack.c.l.s4 1934713408
        %v1237 = vunpack.c.0.s8 %v1236
        %v1238 = vlaneseq
        %v1239 = vshrl.u32 %v1238, 7
        %v1240 = vsub.s32 %v1237, %v1239
        %v1241 = vrot.slane %v1233, %v1240
        %v1243 = vunpack.c.l.s4 1934713408
        %v1244 = vunpack.c.0.s8 %v1243
        %v1245 = vlaneseq
        %v1246 = vshrl.u32 %v1245, 7
        %v1247 = vsub.s32 %v1244, %v1246
        %v1248 = vrot.slane %v1234, %v1247
        %v1249 = vcombine.low %v1193, %v1209
        %v1250 = vcombine.high %v1193, %v1209
        %v1252 = vunpack.c.l.s4 1934713408
        %v1253 = vunpack.c.0.s8 %v1252
        %v1254 = vlaneseq
        %v1255 = vshrl.u32 %v1254, 7
        %v1256 = vsub.s32 %v1253, %v1255
        %v1257 = vrot.slane %v1249, %v1256
        %v1259 = vunpack.c.l.s4 1934713408
        %v1260 = vunpack.c.0.s8 %v1259
        %v1261 = vlaneseq
        %v1262 = vshrl.u32 %v1261, 7
        %v1263 = vsub.s32 %v1260, %v1262
        %v1264 = vrot.slane %v1250, %v1263
        %v1265 = vcombine.low %v1200, %v1216
        %v1266 = vcombine.high %v1200, %v1216
        %v1268 = vunpack.c.l.s4 1934713408
        %v1269 = vunpack.c.0.s8 %v1268
        %v1270 = vlaneseq
        %v1271 = vshrl.u32 %v1270, 7
        %v1272 = vsub.s32 %v1269, %v1271
        %v1273 = vrot.slane %v1265, %v1272
        %v1275 = vunpack.c.l.s4 1934713408
        %v1276 = vunpack.c.0.s8 %v1275
        %v1277 = vlaneseq
        %v1278 = vshrl.u32 %v1277, 7
        %v1279 = vsub.s32 %v1276, %v1278
        %v1280 = vrot.slane %v1266, %v1279
        %v1281 = vcombine.low %v1225, %v1257
        %v1282 = vcombine.high %v1225, %v1257
        %v1283 = vcombine.low %v1232, %v1264
        %v1284 = vcombine.high %v1232, %v1264
        %v1285 = vcombine.low %v1241, %v1273
        %v1286 = vcombine.high %v1241, %v1273
        %v1287 = vcombine.low %v1248, %v1280
        %v1288 = vcombine.high %v1248, %v1280
        %v1289 = vcombine.low %v805, %v915
        %v1290 = vcombine.high %v805, %v915
        %v1292 = vunpack.c.l.s4 1983009808
        %v1293 = vunpack.c.0.s8 %v1292
        %v1294 = vlaneseq
        %v1295 = vshrl.u32 %v1294, 7
        %v1296 = vsub.s32 %v1293, %v1295
        %v1297 = vrot.slane %v1289, %v1296
        %v1299 = vunpack.c.l.s4 1983009808
        %v1300 = vunpack.c.0.s8 %v1299
        %v1301 = vlaneseq
        %v1302 = vshrl.u32 %v1301, 7
        %v1303 = vsub.s32 %v1300, %v1302
        %v1304 = vrot.slane %v1290, %v1303
        %v1305 = vcombine.low %v900, %v921
        %v1306 = vcombine.high %v900, %v921
        %v1308 = vunpack.c.l.s4 1983009808
        %v1309 = vunpack.c.0.s8 %v1308
        %v1310 = vlaneseq
        %v1311 = vshrl.u32 %v1310, 7
        %v1312 = vsub.s32 %v1309, %v1311
        %v1313 = vrot.slane %v1305, %v1312
        %v1315 = vunpack.c.l.s4 1983009808
        %v1316 = vunpack.c.0.s8 %v1315
        %v1317 = vlaneseq
        %v1318 = vshrl.u32 %v1317, 7
        %v1319 = vsub.s32 %v1316, %v1318
        %v1320 = vrot.slane %v1306, %v1319
        %v1321 = vcombine.low %v927, %v948
        %v1322 = vcombine.high %v927, %v948
        %v1324 = vunpack.c.l.s4 1983009808
        %v1325 = vunpack.c.0.s8 %v1324
        %v1326 = vlaneseq
        %v1327 = vshrl.u32 %v1326, 7
        %v1328 = vsub.s32 %v1325, %v1327
        %v1329 = vrot.slane %v1321, %v1328
        %v1331 = vunpack.c.l.s4 1983009808
        %v1332 = vunpack.c.0.s8 %v1331
        %v1333 = vlaneseq
        %v1334 = vshrl.u32 %v1333, 7
        %v1335 = vsub.s32 %v1332, %v1334
        %v1336 = vrot.slane %v1322, %v1335
        %v1337 = vcombine.low %v942, %v954
        %v1338 = vcombine.high %v942, %v954
        %v1340 = vunpack.c.l.s4 1983009808
        %v1341 = vunpack.c.0.s8 %v1340
        %v1342 = vlaneseq
        %v1343 = vshrl.u32 %v1342, 7
        %v1344 = vsub.s32 %v1341, %v1343
        %v1345 = vrot.slane %v1337, %v1344
        %v1347 = vunpack.c.l.s4 1983009808
        %v1348 = vunpack.c.0.s8 %v1347
        %v1349 = vlaneseq
        %v1350 = vshrl.u32 %v1349, 7
        %v1351 = vsub.s32 %v1348, %v1350
        %v1352 = vrot.slane %v1338, %v1351
        %v1353 = vcombine.low %v1297, %v1313
        %v1354 = vcombine.high %v1297, %v1313
        %v1356 = vunpack.c.l.s4 1934713408
        %v1357 = vunpack.c.0.s8 %v1356
        %v1358 = vlaneseq
        %v1359 = vshrl.u32 %v1358, 7
        %v1360 = vsub.s32 %v1357, %v1359
        %v1361 = vrot.slane %v1353, %v1360
        %v1363 = vunpack.c.l.s4 1934713408
        %v1364 = vunpack.c.0.s8 %v1363
        %v1365 = vlaneseq
        %v1366 = vshrl.u32 %v1365, 7
        %v1367 = vsub.s32 %v1364, %v1366
        %v1368 = vrot.slane %v1354, %v1367
        %v1369 = vcombine.low %v1304, %v1320
        %v1370 = vcombine.high %v1304, %v1320
        %v1372 = vunpack.c.l.s4 1934713408
        %v1373 = vunpack.c.0.s8 %v1372
        %v1374 = vlaneseq
        %v1375 = vshrl.u32 %v1374, 7
        %v1376 = vsub.s32 %v1373, %v1375
        %v1377 = vrot.slane %v1369, %v1376
        %v1379 = vunpack.c.l.s4 1934713408
        %v1380 = vunpack.c.0.s8 %v1379
        %v1381 = vlaneseq
        %v1382 = vshrl.u32 %v1381, 7
        %v1383 = vsub.s32 %v1380, %v1382
        %v1384 = vrot.slane %v1370, %v1383
        %v1385 = vcombine.low %v1329, %v1345
        %v1386 = vcombine.high %v1329, %v1345
        %v1388 = vunpack.c.l.s4 1934713408
        %v1389 = vunpack.c.0.s8 %v1388
        %v1390 = vlaneseq
        %v1391 = vshrl.u32 %v1390, 7
        %v1392 = vsub.s32 %v1389, %v1391
        %v1393 = vrot.slane %v1385, %v1392
        %v1395 = vunpack.c.l.s4 1934713408
        %v1396 = vunpack.c.0.s8 %v1395
        %v1397 = vlaneseq
        %v1398 = vshrl.u32 %v1397, 7
        %v1399 = vsub.s32 %v1396, %v1398
        %v1400 = vrot.slane %v1386, %v1399
        %v1401 = vcombine.low %v1336, %v1352
        %v1402 = vcombine.high %v1336, %v1352
        %v1404 = vunpack.c.l.s4 1934713408
        %v1405 = vunpack.c.0.s8 %v1404
        %v1406 = vlaneseq
        %v1407 = vshrl.u32 %v1406, 7
        %v1408 = vsub.s32 %v1405, %v1407
        %v1409 = vrot.slane %v1401, %v1408
        %v1411 = vunpack.c.l.s4 1934713408
        %v1412 = vunpack.c.0.s8 %v1411
        %v1413 = vlaneseq
        %v1414 = vshrl.u32 %v1413, 7
        %v1415 = vsub.s32 %v1412, %v1414
        %v1416 = vrot.slane %v1402, %v1415
        %v1417 = vcombine.low %v1361, %v1393
        %v1418 = vcombine.high %v1361, %v1393
        %v1419 = vcombine.low %v1368, %v1400
        %v1420 = vcombine.high %v1368, %v1400
        %v1421 = vcombine.low %v1377, %v1409
        %v1422 = vcombine.high %v1377, %v1409
        %v1423 = vcombine.low %v1384, %v1416
        %v1424 = vcombine.high %v1384, %v1416
        %v1425 = vcombine.low %v850, %v976
        %v1426 = vcombine.high %v850, %v976
        %v1428 = vunpack.c.l.s4 1983009808
        %v1429 = vunpack.c.0.s8 %v1428
        %v1430 = vlaneseq
        %v1431 = vshrl.u32 %v1430, 7
        %v1432 = vsub.s32 %v1429, %v1431
        %v1433 = vrot.slane %v1425, %v1432
        %v1435 = vunpack.c.l.s4 1983009808
        %v1436 = vunpack.c.0.s8 %v1435
        %v1437 = vlaneseq
        %v1438 = vshrl.u32 %v1437, 7
        %v1439 = vsub.s32 %v1436, %v1438
        %v1440 = vrot.slane %v1426, %v1439
        %v1441 = vcombine.low %v962, %v982
        %v1442 = vcombine.high %v962, %v982
        %v1444 = vunpack.c.l.s4 1983009808
        %v1445 = vunpack.c.0.s8 %v1444
        %v1446 = vlaneseq
        %v1447 = vshrl.u32 %v1446, 7
        %v1448 = vsub.s32 %v1445, %v1447
        %v1449 = vrot.slane %v1441, %v1448
        %v1451 = vunpack.c.l.s4 1983009808
        %v1452 = vunpack.c.0.s8 %v1451
        %v1453 = vlaneseq
        %v1454 = vshrl.u32 %v1453, 7
        %v1455 = vsub.s32 %v1452, %v1454
        %v1456 = vrot.slane %v1442, %v1455
        %v1457 = vcombine.low %v988, %v1008
        %v1458 = vcombine.high %v988, %v1008
        %v1460 = vunpack.c.l.s4 1983009808
        %v1461 = vunpack.c.0.s8 %v1460
        %v1462 = vlaneseq
        %v1463 = vshrl.u32 %v1462, 7
        %v1464 = vsub.s32 %v1461, %v1463
        %v1465 = vrot.slane %v1457, %v1464
        %v1467 = vunpack.c.l.s4 1983009808
        %v1468 = vunpack.c.0.s8 %v1467
        %v1469 = vlaneseq
        %v1470 = vshrl.u32 %v1469, 7
        %v1471 = vsub.s32 %v1468, %v1470
        %v1472 = vrot.slane %v1458, %v1471
        %v1473 = vcombine.low %v1002, %v1014
        %v1474 = vcombine.high %v1002, %v1014
        %v1476 = vunpack.c.l.s4 1983009808
        %v1477 = vunpack.c.0.s8 %v1476
        %v1478 = vlaneseq
        %v1479 = vshrl.u32 %v1478, 7
        %v1480 = vsub.s32 %v1477, %v1479
        %v1481 = vrot.slane %v1473, %v1480
        %v1483 = vunpack.c.l.s4 1983009808
        %v1484 = vunpack.c.0.s8 %v1483
        %v1485 = vlaneseq
        %v1486 = vshrl.u32 %v1485, 7
        %v1487 = vsub.s32 %v1484, %v1486
        %v1488 = vrot.slane %v1474, %v1487
        %v1489 = vcombine.low %v1433, %v1449
        %v1490 = vcombine.high %v1433, %v1449
        %v1492 = vunpack.c.l.s4 1934713408
        %v1493 = vunpack.c.0.s8 %v1492
        %v1494 = vlaneseq
        %v1495 = vshrl.u32 %v1494, 7
        %v1496 = vsub.s32 %v1493, %v1495
        %v1497 = vrot.slane %v1489, %v1496
        %v1499 = vunpack.c.l.s4 1934713408
        %v1500 = vunpack.c.0.s8 %v1499
        %v1501 = vlaneseq
        %v1502 = vshrl.u32 %v1501, 7
        %v1503 = vsub.s32 %v1500, %v1502
        %v1504 = vrot.slane %v1490, %v1503
        %v1505 = vcombine.low %v1440, %v1456
        %v1506 = vcombine.high %v1440, %v1456
        %v1508 = vunpack.c.l.s4 1934713408
        %v1509 = vunpack.c.0.s8 %v1508
        %v1510 = vlaneseq
        %v1511 = vshrl.u32 %v1510, 7
        %v1512 = vsub.s32 %v1509, %v1511
        %v1513 = vrot.slane %v1505, %v1512
        %v1515 = vunpack.c.l.s4 1934713408
        %v1516 = vunpack.c.0.s8 %v1515
        %v1517 = vlaneseq
        %v1518 = vshrl.u32 %v1517, 7
        %v1519 = vsub.s32 %v1516, %v1518
        %v1520 = vrot.slane %v1506, %v1519
        %v1521 = vcombine.low %v1465, %v1481
        %v1522 = vcombine.high %v1465, %v1481
        %v1524 = vunpack.c.l.s4 1934713408
        %v1525 = vunpack.c.0.s8 %v1524
        %v1526 = vlaneseq
        %v1527 = vshrl.u32 %v1526, 7
        %v1528 = vsub.s32 %v1525, %v1527
        %v1529 = vrot.slane %v1521, %v1528
        %v1531 = vunpack.c.l.s4 1934713408
        %v1532 = vunpack.c.0.s8 %v1531
        %v1533 = vlaneseq
        %v1534 = vshrl.u32 %v1533, 7
        %v1535 = vsub.s32 %v1532, %v1534
        %v1536 = vrot.slane %v1522, %v1535
        %v1537 = vcombine.low %v1472, %v1488
        %v1538 = vcombine.high %v1472, %v1488
        %v1540 = vunpack.c.l.s4 1934713408
        %v1541 = vunpack.c.0.s8 %v1540
        %v1542 = vlaneseq
        %v1543 = vshrl.u32 %v1542, 7
        %v1544 = vsub.s32 %v1541, %v1543
        %v1545 = vrot.slane %v1537, %v1544
        %v1547 = vunpack.c.l.s4 1934713408
        %v1548 = vunpack.c.0.s8 %v1547
        %v1549 = vlaneseq
        %v1550 = vshrl.u32 %v1549, 7
        %v1551 = vsub.s32 %v1548, %v1550
        %v1552 = vrot.slane %v1538, %v1551
        %v1553 = vcombine.low %v1497, %v1529
        %v1554 = vcombine.high %v1497, %v1529
        %v1555 = vcombine.low %v1504, %v1536
        %v1556 = vcombine.high %v1504, %v1536
        %v1557 = vcombine.low %v1513, %v1545
        %v1558 = vcombine.high %v1513, %v1545
        %v1559 = vcombine.low %v1520, %v1552
        %v1560 = vcombine.high %v1520, %v1552
        %v1561 = vcombine.low %v1145, %v1147
        %v1562 = vcombine.high %v1145, %v1147
        %v1564 = vunpack.c.l.s4 1983009808
        %v1565 = vunpack.c.0.s8 %v1564
        %v1566 = vlaneseq
        %v1567 = vshrl.u32 %v1566, 7
        %v1568 = vsub.s32 %v1565, %v1567
        %v1569 = vrot.slane %v1561, %v1568
        %v1571 = vunpack.c.l.s4 1983009808
        %v1572 = vunpack.c.0.s8 %v1571
        %v1573 = vlaneseq
        %v1574 = vshrl.u32 %v1573, 7
        %v1575 = vsub.s32 %v1572, %v1574
        %v1576 = vrot.slane %v1562, %v1575
        %v1577 = vcombine.low %v1146, %v1148
        %v1578 = vcombine.high %v1146, %v1148
        %v1580 = vunpack.c.l.s4 1983009808
        %v1581 = vunpack.c.0.s8 %v1580
        %v1582 = vlaneseq
        %v1583 = vshrl.u32 %v1582, 7
        %v1584 = vsub.s32 %v1581, %v1583
        %v1585 = vrot.slane %v1577, %v1584
        %v1587 = vunpack.c.l.s4 1983009808
        %v1588 = vunpack.c.0.s8 %v1587
        %v1589 = vlaneseq
        %v1590 = vshrl.u32 %v1589, 7
        %v1591 = vsub.s32 %v1588, %v1590
        %v1592 = vrot.slane %v1578, %v1591
        %v1593 = vcombine.low %v1569, %v1585
        %v1594 = vcombine.high %v1569, %v1585
        %v1596 = vunpack.c.l.s4 1934713408
        %v1597 = vunpack.c.0.s8 %v1596
        %v1598 = vlaneseq
        %v1599 = vshrl.u32 %v1598, 7
        %v1600 = vsub.s32 %v1597, %v1599
        %v1601 = vrot.slane %v1593, %v1600
        %v1603 = vunpack.c.l.s4 1934713408
        %v1604 = vunpack.c.0.s8 %v1603
        %v1605 = vlaneseq
        %v1606 = vshrl.u32 %v1605, 7
        %v1607 = vsub.s32 %v1604, %v1606
        %v1608 = vrot.slane %v1594, %v1607
        %v1609 = vcombine.low %v1576, %v1592
        %v1610 = vcombine.high %v1576, %v1592
        %v1612 = vunpack.c.l.s4 1934713408
        %v1613 = vunpack.c.0.s8 %v1612
        %v1614 = vlaneseq
        %v1615 = vshrl.u32 %v1614, 7
        %v1616 = vsub.s32 %v1613, %v1615
        %v1617 = vrot.slane %v1609, %v1616
        %v1619 = vunpack.c.l.s4 1934713408
        %v1620 = vunpack.c.0.s8 %v1619
        %v1621 = vlaneseq
        %v1622 = vshrl.u32 %v1621, 7
        %v1623 = vsub.s32 %v1620, %v1622
        %v1624 = vrot.slane %v1610, %v1623
        %v1625 = vcombine.high %v1601, 0.0
        %v1626 = vcombine.high %v1608, 0.0
        %v1627 = vcombine.high %v1617, 0.0
        %v1628 = vcombine.high %v1624, 0.0
        %v1629 = vcombine.low %v1281, %v1283
        %v1630 = vcombine.high %v1281, %v1283
        %v1632 = vunpack.c.l.s4 1983009808
        %v1633 = vunpack.c.0.s8 %v1632
        %v1634 = vlaneseq
        %v1635 = vshrl.u32 %v1634, 7
        %v1636 = vsub.s32 %v1633, %v1635
        %v1637 = vrot.slane %v1629, %v1636
        %v1639 = vunpack.c.l.s4 1983009808
        %v1640 = vunpack.c.0.s8 %v1639
        %v1641 = vlaneseq
        %v1642 = vshrl.u32 %v1641, 7
        %v1643 = vsub.s32 %v1640, %v1642
        %v1644 = vrot.slane %v1630, %v1643
        %v1645 = vcombine.low %v1282, %v1284
        %v1646 = vcombine.high %v1282, %v1284
        %v1648 = vunpack.c.l.s4 1983009808
        %v1649 = vunpack.c.0.s8 %v1648
        %v1650 = vlaneseq
        %v1651 = vshrl.u32 %v1650, 7
        %v1652 = vsub.s32 %v1649, %v1651
        %v1653 = vrot.slane %v1645, %v1652
        %v1655 = vunpack.c.l.s4 1983009808
        %v1656 = vunpack.c.0.s8 %v1655
        %v1657 = vlaneseq
        %v1658 = vshrl.u32 %v1657, 7
        %v1659 = vsub.s32 %v1656, %v1658
        %v1660 = vrot.slane %v1646, %v1659
        %v1661 = vcombine.low %v1637, %v1653
        %v1662 = vcombine.high %v1637, %v1653
        %v1664 = vunpack.c.l.s4 1934713408
        %v1665 = vunpack.c.0.s8 %v1664
        %v1666 = vlaneseq
        %v1667 = vshrl.u32 %v1666, 7
        %v1668 = vsub.s32 %v1665, %v1667
        %v1669 = vrot.slane %v1661, %v1668
        %v1671 = vunpack.c.l.s4 1934713408
        %v1672 = vunpack.c.0.s8 %v1671
        %v1673 = vlaneseq
        %v1674 = vshrl.u32 %v1673, 7
        %v1675 = vsub.s32 %v1672, %v1674
        %v1676 = vrot.slane %v1662, %v1675
        %v1677 = vcombine.low %v1644, %v1660
        %v1678 = vcombine.high %v1644, %v1660
        %v1680 = vunpack.c.l.s4 1934713408
        %v1681 = vunpack.c.0.s8 %v1680
        %v1682 = vlaneseq
        %v1683 = vshrl.u32 %v1682, 7
        %v1684 = vsub.s32 %v1681, %v1683
        %v1685 = vrot.slane %v1677, %v1684
        %v1687 = vunpack.c.l.s4 1934713408
        %v1688 = vunpack.c.0.s8 %v1687
        %v1689 = vlaneseq
        %v1690 = vshrl.u32 %v1689, 7
        %v1691 = vsub.s32 %v1688, %v1690
        %v1692 = vrot.slane %v1678, %v1691
        %v1693 = vcombine.high %v1669, 0.0
        %v1694 = vcombine.high %v1676, 0.0
        %v1695 = vcombine.high %v1685, 0.0
        %v1696 = vcombine.high %v1692, 0.0
        %v1697 = vcombine.low %v1149, %v1151
        %v1698 = vcombine.high %v1149, %v1151
        %v1700 = vunpack.c.l.s4 1983009808
        %v1701 = vunpack.c.0.s8 %v1700
        %v1702 = vlaneseq
        %v1703 = vshrl.u32 %v1702, 7
        %v1704 = vsub.s32 %v1701, %v1703
        %v1705 = vrot.slane %v1697, %v1704
        %v1707 = vunpack.c.l.s4 1983009808
        %v1708 = vunpack.c.0.s8 %v1707
        %v1709 = vlaneseq
        %v1710 = vshrl.u32 %v1709, 7
        %v1711 = vsub.s32 %v1708, %v1710
        %v1712 = vrot.slane %v1698, %v1711
        %v1713 = vcombine.low %v1150, %v1152
        %v1714 = vcombine.high %v1150, %v1152
        %v1716 = vunpack.c.l.s4 1983009808
        %v1717 = vunpack.c.0.s8 %v1716
        %v1718 = vlaneseq
        %v1719 = vshrl.u32 %v1718, 7
        %v1720 = vsub.s32 %v1717, %v1719
        %v1721 = vrot.slane %v1713, %v1720
        %v1723 = vunpack.c.l.s4 1983009808
        %v1724 = vunpack.c.0.s8 %v1723
        %v1725 = vlaneseq
        %v1726 = vshrl.u32 %v1725, 7
        %v1727 = vsub.s32 %v1724, %v1726
        %v1728 = vrot.slane %v1714, %v1727
        %v1729 = vcombine.low %v1705, %v1721
        %v1730 = vcombine.high %v1705, %v1721
        %v1732 = vunpack.c.l.s4 1934713408
        %v1733 = vunpack.c.0.s8 %v1732
        %v1734 = vlaneseq
        %v1735 = vshrl.u32 %v1734, 7
        %v1736 = vsub.s32 %v1733, %v1735
        %v1737 = vrot.slane %v1729, %v1736
        %v1739 = vunpack.c.l.s4 1934713408
        %v1740 = vunpack.c.0.s8 %v1739
        %v1741 = vlaneseq
        %v1742 = vshrl.u32 %v1741, 7
        %v1743 = vsub.s32 %v1740, %v1742
        %v1744 = vrot.slane %v1730, %v1743
        %v1745 = vcombine.low %v1712, %v1728
        %v1746 = vcombine.high %v1712, %v1728
        %v1748 = vunpack.c.l.s4 1934713408
        %v1749 = vunpack.c.0.s8 %v1748
        %v1750 = vlaneseq
        %v1751 = vshrl.u32 %v1750, 7
        %v1752 = vsub.s32 %v1749, %v1751
        %v1753 = vrot.slane %v1745, %v1752
        %v1755 = vunpack.c.l.s4 1934713408
        %v1756 = vunpack.c.0.s8 %v1755
        %v1757 = vlaneseq
        %v1758 = vshrl.u32 %v1757, 7
        %v1759 = vsub.s32 %v1756, %v1758
        %v1760 = vrot.slane %v1746, %v1759
        %v1761 = vcombine.high %v1737, 0.0
        %v1762 = vcombine.high %v1744, 0.0
        %v1763 = vcombine.high %v1753, 0.0
        %v1764 = vcombine.high %v1760, 0.0
        %v1765 = vcombine.low %v1285, %v1287
        %v1766 = vcombine.high %v1285, %v1287
        %v1768 = vunpack.c.l.s4 1983009808
        %v1769 = vunpack.c.0.s8 %v1768
        %v1770 = vlaneseq
        %v1771 = vshrl.u32 %v1770, 7
        %v1772 = vsub.s32 %v1769, %v1771
        %v1773 = vrot.slane %v1765, %v1772
        %v1775 = vunpack.c.l.s4 1983009808
        %v1776 = vunpack.c.0.s8 %v1775
        %v1777 = vlaneseq
        %v1778 = vshrl.u32 %v1777, 7
        %v1779 = vsub.s32 %v1776, %v1778
        %v1780 = vrot.slane %v1766, %v1779
        %v1781 = vcombine.low %v1286, %v1288
        %v1782 = vcombine.high %v1286, %v1288
        %v1784 = vunpack.c.l.s4 1983009808
        %v1785 = vunpack.c.0.s8 %v1784
        %v1786 = vlaneseq
        %v1787 = vshrl.u32 %v1786, 7
        %v1788 = vsub.s32 %v1785, %v1787
        %v1789 = vrot.slane %v1781, %v1788
        %v1791 = vunpack.c.l.s4 1983009808
        %v1792 = vunpack.c.0.s8 %v1791
        %v1793 = vlaneseq
        %v1794 = vshrl.u32 %v1793, 7
        %v1795 = vsub.s32 %v1792, %v1794
        %v1796 = vrot.slane %v1782, %v1795
        %v1797 = vcombine.low %v1773, %v1789
        %v1798 = vcombine.high %v1773, %v1789
        %v1800 = vunpack.c.l.s4 1934713408
        %v1801 = vunpack.c.0.s8 %v1800
        %v1802 = vlaneseq
        %v1803 = vshrl.u32 %v1802, 7
        %v1804 = vsub.s32 %v1801, %v1803
        %v1805 = vrot.slane %v1797, %v1804
        %v1807 = vunpack.c.l.s4 1934713408
        %v1808 = vunpack.c.0.s8 %v1807
        %v1809 = vlaneseq
        %v1810 = vshrl.u32 %v1809, 7
        %v1811 = vsub.s32 %v1808, %v1810
        %v1812 = vrot.slane %v1798, %v1811
        %v1813 = vcombine.low %v1780, %v1796
        %v1814 = vcombine.high %v1780, %v1796
        %v1816 = vunpack.c.l.s4 1934713408
        %v1817 = vunpack.c.0.s8 %v1816
        %v1818 = vlaneseq
        %v1819 = vshrl.u32 %v1818, 7
        %v1820 = vsub.s32 %v1817, %v1819
        %v1821 = vrot.slane %v1813, %v1820
        %v1823 = vunpack.c.l.s4 1934713408
        %v1824 = vunpack.c.0.s8 %v1823
        %v1825 = vlaneseq
        %v1826 = vshrl.u32 %v1825, 7
        %v1827 = vsub.s32 %v1824, %v1826
        %v1828 = vrot.slane %v1814, %v1827
        %v1829 = vcombine.high %v1805, 0.0
        %v1830 = vcombine.high %v1812, 0.0
        %v1831 = vcombine.high %v1821, 0.0
        %v1832 = vcombine.high %v1828, 0.0
        %v1833 = vcombine.low %v1417, %v1419
        %v1834 = vcombine.high %v1417, %v1419
        %v1836 = vunpack.c.l.s4 1983009808
        %v1837 = vunpack.c.0.s8 %v1836
        %v1838 = vlaneseq
        %v1839 = vshrl.u32 %v1838, 7
        %v1840 = vsub.s32 %v1837, %v1839
        %v1841 = vrot.slane %v1833, %v1840
        %v1843 = vunpack.c.l.s4 1983009808
        %v1844 = vunpack.c.0.s8 %v1843
        %v1845 = vlaneseq
        %v1846 = vshrl.u32 %v1845, 7
        %v1847 = vsub.s32 %v1844, %v1846
        %v1848 = vrot.slane %v1834, %v1847
        %v1849 = vcombine.low %v1418, %v1420
        %v1850 = vcombine.high %v1418, %v1420
        %v1852 = vunpack.c.l.s4 1983009808
        %v1853 = vunpack.c.0.s8 %v1852
        %v1854 = vlaneseq
        %v1855 = vshrl.u32 %v1854, 7
        %v1856 = vsub.s32 %v1853, %v1855
        %v1857 = vrot.slane %v1849, %v1856
        %v1859 = vunpack.c.l.s4 1983009808
        %v1860 = vunpack.c.0.s8 %v1859
        %v1861 = vlaneseq
        %v1862 = vshrl.u32 %v1861, 7
        %v1863 = vsub.s32 %v1860, %v1862
        %v1864 = vrot.slane %v1850, %v1863
        %v1865 = vcombine.low %v1841, %v1857
        %v1866 = vcombine.high %v1841, %v1857
        %v1868 = vunpack.c.l.s4 1934713408
        %v1869 = vunpack.c.0.s8 %v1868
        %v1870 = vlaneseq
        %v1871 = vshrl.u32 %v1870, 7
        %v1872 = vsub.s32 %v1869, %v1871
        %v1873 = vrot.slane %v1865, %v1872
        %v1875 = vunpack.c.l.s4 1934713408
        %v1876 = vunpack.c.0.s8 %v1875
        %v1877 = vlaneseq
        %v1878 = vshrl.u32 %v1877, 7
        %v1879 = vsub.s32 %v1876, %v1878
        %v1880 = vrot.slane %v1866, %v1879
        %v1881 = vcombine.low %v1848, %v1864
        %v1882 = vcombine.high %v1848, %v1864
        %v1884 = vunpack.c.l.s4 1934713408
        %v1885 = vunpack.c.0.s8 %v1884
        %v1886 = vlaneseq
        %v1887 = vshrl.u32 %v1886, 7
        %v1888 = vsub.s32 %v1885, %v1887
        %v1889 = vrot.slane %v1881, %v1888
        %v1891 = vunpack.c.l.s4 1934713408
        %v1892 = vunpack.c.0.s8 %v1891
        %v1893 = vlaneseq
        %v1894 = vshrl.u32 %v1893, 7
        %v1895 = vsub.s32 %v1892, %v1894
        %v1896 = vrot.slane %v1882, %v1895
        %v1897 = vcombine.high %v1873, 0.0
        %v1898 = vcombine.high %v1880, 0.0
        %v1899 = vcombine.high %v1889, 0.0
        %v1900 = vcombine.high %v1896, 0.0
        %v1901 = vcombine.low %v1553, %v1555
        %v1902 = vcombine.high %v1553, %v1555
        %v1904 = vunpack.c.l.s4 1983009808
        %v1905 = vunpack.c.0.s8 %v1904
        %v1906 = vlaneseq
        %v1907 = vshrl.u32 %v1906, 7
        %v1908 = vsub.s32 %v1905, %v1907
        %v1909 = vrot.slane %v1901, %v1908
        %v1911 = vunpack.c.l.s4 1983009808
        %v1912 = vunpack.c.0.s8 %v1911
        %v1913 = vlaneseq
        %v1914 = vshrl.u32 %v1913, 7
        %v1915 = vsub.s32 %v1912, %v1914
        %v1916 = vrot.slane %v1902, %v1915
        %v1917 = vcombine.low %v1554, %v1556
        %v1918 = vcombine.high %v1554, %v1556
        %v1920 = vunpack.c.l.s4 1983009808
        %v1921 = vunpack.c.0.s8 %v1920
        %v1922 = vlaneseq
        %v1923 = vshrl.u32 %v1922, 7
        %v1924 = vsub.s32 %v1921, %v1923
        %v1925 = vrot.slane %v1917, %v1924
        %v1927 = vunpack.c.l.s4 1983009808
        %v1928 = vunpack.c.0.s8 %v1927
        %v1929 = vlaneseq
        %v1930 = vshrl.u32 %v1929, 7
        %v1931 = vsub.s32 %v1928, %v1930
        %v1932 = vrot.slane %v1918, %v1931
        %v1933 = vcombine.low %v1909, %v1925
        %v1934 = vcombine.high %v1909, %v1925
        %v1936 = vunpack.c.l.s4 1934713408
        %v1937 = vunpack.c.0.s8 %v1936
        %v1938 = vlaneseq
        %v1939 = vshrl.u32 %v1938, 7
        %v1940 = vsub.s32 %v1937, %v1939
        %v1941 = vrot.slane %v1933, %v1940
        %v1943 = vunpack.c.l.s4 1934713408
        %v1944 = vunpack.c.0.s8 %v1943
        %v1945 = vlaneseq
        %v1946 = vshrl.u32 %v1945, 7
        %v1947 = vsub.s32 %v1944, %v1946
        %v1948 = vrot.slane %v1934, %v1947
        %v1949 = vcombine.low %v1916, %v1932
        %v1950 = vcombine.high %v1916, %v1932
        %v1952 = vunpack.c.l.s4 1934713408
        %v1953 = vunpack.c.0.s8 %v1952
        %v1954 = vlaneseq
        %v1955 = vshrl.u32 %v1954, 7
        %v1956 = vsub.s32 %v1953, %v1955
        %v1957 = vrot.slane %v1949, %v1956
        %v1959 = vunpack.c.l.s4 1934713408
        %v1960 = vunpack.c.0.s8 %v1959
        %v1961 = vlaneseq
        %v1962 = vshrl.u32 %v1961, 7
        %v1963 = vsub.s32 %v1960, %v1962
        %v1964 = vrot.slane %v1950, %v1963
        %v1965 = vcombine.high %v1941, 0.0
        %v1966 = vcombine.high %v1948, 0.0
        %v1967 = vcombine.high %v1957, 0.0
        %v1968 = vcombine.high %v1964, 0.0
        %v1969 = vcombine.low %v1421, %v1423
        %v1970 = vcombine.high %v1421, %v1423
        %v1972 = vunpack.c.l.s4 1983009808
        %v1973 = vunpack.c.0.s8 %v1972
        %v1974 = vlaneseq
        %v1975 = vshrl.u32 %v1974, 7
        %v1976 = vsub.s32 %v1973, %v1975
        %v1977 = vrot.slane %v1969, %v1976
        %v1979 = vunpack.c.l.s4 1983009808
        %v1980 = vunpack.c.0.s8 %v1979
        %v1981 = vlaneseq
        %v1982 = vshrl.u32 %v1981, 7
        %v1983 = vsub.s32 %v1980, %v1982
        %v1984 = vrot.slane %v1970, %v1983
        %v1985 = vcombine.low %v1422, %v1424
        %v1986 = vcombine.high %v1422, %v1424
        %v1988 = vunpack.c.l.s4 1983009808
        %v1989 = vunpack.c.0.s8 %v1988
        %v1990 = vlaneseq
        %v1991 = vshrl.u32 %v1990, 7
        %v1992 = vsub.s32 %v1989, %v1991
        %v1993 = vrot.slane %v1985, %v1992
        %v1995 = vunpack.c.l.s4 1983009808
        %v1996 = vunpack.c.0.s8 %v1995
        %v1997 = vlaneseq
        %v1998 = vshrl.u32 %v1997, 7
        %v1999 = vsub.s32 %v1996, %v1998
        %v2000 = vrot.slane %v1986, %v1999
        %v2001 = vcombine.low %v1977, %v1993
        %v2002 = vcombine.high %v1977, %v1993
        %v2004 = vunpack.c.l.s4 1934713408
        %v2005 = vunpack.c.0.s8 %v2004
        %v2006 = vlaneseq
        %v2007 = vshrl.u32 %v2006, 7
        %v2008 = vsub.s32 %v2005, %v2007
        %v2009 = vrot.slane %v2001, %v2008
        %v2011 = vunpack.c.l.s4 1934713408
        %v2012 = vunpack.c.0.s8 %v2011
        %v2013 = vlaneseq
        %v2014 = vshrl.u32 %v2013, 7
        %v2015 = vsub.s32 %v2012, %v2014
        %v2016 = vrot.slane %v2002, %v2015
        %v2017 = vcombine.low %v1984, %v2000
        %v2018 = vcombine.high %v1984, %v2000
        %v2020 = vunpack.c.l.s4 1934713408
        %v2021 = vunpack.c.0.s8 %v2020
        %v2022 = vlaneseq
        %v2023 = vshrl.u32 %v2022, 7
        %v2024 = vsub.s32 %v2021, %v2023
        %v2025 = vrot.slane %v2017, %v2024
        %v2027 = vunpack.c.l.s4 1934713408
        %v2028 = vunpack.c.0.s8 %v2027
        %v2029 = vlaneseq
        %v2030 = vshrl.u32 %v2029, 7
        %v2031 = vsub.s32 %v2028, %v2030
        %v2032 = vrot.slane %v2018, %v2031
        %v2033 = vcombine.high %v2009, 0.0
        %v2034 = vcombine.high %v2016, 0.0
        %v2035 = vcombine.high %v2025, 0.0
        %v2036 = vcombine.high %v2032, 0.0
        %v2037 = vcombine.low %v1557, %v1559
        %v2038 = vcombine.high %v1557, %v1559
        %v2040 = vunpack.c.l.s4 1983009808
        %v2041 = vunpack.c.0.s8 %v2040
        %v2042 = vlaneseq
        %v2043 = vshrl.u32 %v2042, 7
        %v2044 = vsub.s32 %v2041, %v2043
        %v2045 = vrot.slane %v2037, %v2044
        %v2047 = vunpack.c.l.s4 1983009808
        %v2048 = vunpack.c.0.s8 %v2047
        %v2049 = vlaneseq
        %v2050 = vshrl.u32 %v2049, 7
        %v2051 = vsub.s32 %v2048, %v2050
        %v2052 = vrot.slane %v2038, %v2051
        %v2053 = vcombine.low %v1558, %v1560
        %v2054 = vcombine.high %v1558, %v1560
        %v2056 = vunpack.c.l.s4 1983009808
        %v2057 = vunpack.c.0.s8 %v2056
        %v2058 = vlaneseq
        %v2059 = vshrl.u32 %v2058, 7
        %v2060 = vsub.s32 %v2057, %v2059
        %v2061 = vrot.slane %v2053, %v2060
        %v2063 = vunpack.c.l.s4 1983009808
        %v2064 = vunpack.c.0.s8 %v2063
        %v2065 = vlaneseq
        %v2066 = vshrl.u32 %v2065, 7
        %v2067 = vsub.s32 %v2064, %v2066
        %v2068 = vrot.slane %v2054, %v2067
        %v2069 = vcombine.low %v2045, %v2061
        %v2070 = vcombine.high %v2045, %v2061
        %v2072 = vunpack.c.l.s4 1934713408
        %v2073 = vunpack.c.0.s8 %v2072
        %v2074 = vlaneseq
        %v2075 = vshrl.u32 %v2074, 7
        %v2076 = vsub.s32 %v2073, %v2075
        %v2077 = vrot.slane %v2069, %v2076
        %v2079 = vunpack.c.l.s4 1934713408
        %v2080 = vunpack.c.0.s8 %v2079
        %v2081 = vlaneseq
        %v2082 = vshrl.u32 %v2081, 7
        %v2083 = vsub.s32 %v2080, %v2082
        %v2084 = vrot.slane %v2070, %v2083
        %v2085 = vcombine.low %v2052, %v2068
        %v2086 = vcombine.high %v2052, %v2068
        %v2088 = vunpack.c.l.s4 1934713408
        %v2089 = vunpack.c.0.s8 %v2088
        %v2090 = vlaneseq
        %v2091 = vshrl.u32 %v2090, 7
        %v2092 = vsub.s32 %v2089, %v2091
        %v2093 = vrot.slane %v2085, %v2092
        %v2095 = vunpack.c.l.s4 1934713408
        %v2096 = vunpack.c.0.s8 %v2095
        %v2097 = vlaneseq
        %v2098 = vshrl.u32 %v2097, 7
        %v2099 = vsub.s32 %v2096, %v2098
        %v2100 = vrot.slane %v2086, %v2099
        %v2101 = vcombine.high %v2077, 0.0
        %v2102 = vcombine.high %v2084, 0.0
        %v2103 = vcombine.high %v2093, 0.0
        %v2104 = vcombine.high %v2100, 0.0
        %v2105 = vcombine.low %v1601, %v1608
        %v2107 = vunpack.c.l.s4 1983009808
        %v2108 = vunpack.c.0.s8 %v2107
        %v2109 = vlaneseq
        %v2110 = vshrl.u32 %v2109, 7
        %v2111 = vsub.s32 %v2108, %v2110
        %v2112 = vrot.slane %v2105, %v2111
        %v2113 = vcombine.low %v1625, %v1626
        %v2115 = vunpack.c.l.s4 1983009808
        %v2116 = vunpack.c.0.s8 %v2115
        %v2117 = vlaneseq
        %v2118 = vshrl.u32 %v2117, 7
        %v2119 = vsub.s32 %v2116, %v2118
        %v2120 = vrot.slane %v2113, %v2119
        %v2121 = vcombine.low %v1617, %v1624
        %v2123 = vunpack.c.l.s4 1983009808
        %v2124 = vunpack.c.0.s8 %v2123
        %v2125 = vlaneseq
        %v2126 = vshrl.u32 %v2125, 7
        %v2127 = vsub.s32 %v2124, %v2126
        %v2128 = vrot.slane %v2121, %v2127
        %v2129 = vcombine.low %v1627, %v1628
        %v2131 = vunpack.c.l.s4 1983009808
        %v2132 = vunpack.c.0.s8 %v2131
        %v2133 = vlaneseq
        %v2134 = vshrl.u32 %v2133, 7
        %v2135 = vsub.s32 %v2132, %v2134
        %v2136 = vrot.slane %v2129, %v2135
        %v2137 = vcombine.low %v2112, %v2120
        %v2138 = vcombine.high %v2112, %v2120
        %v2140 = vunpack.c.l.s4 1934713408
        %v2141 = vunpack.c.0.s8 %v2140
        %v2142 = vlaneseq
        %v2143 = vshrl.u32 %v2142, 7
        %v2144 = vsub.s32 %v2141, %v2143
        %v2145 = vrot.slane %v2137, %v2144
        %v2147 = vunpack.c.l.s4 1934713408
        %v2148 = vunpack.c.0.s8 %v2147
        %v2149 = vlaneseq
        %v2150 = vshrl.u32 %v2149, 7
        %v2151 = vsub.s32 %v2148, %v2150
        %v2152 = vrot.slane %v2138, %v2151
        %v2153 = vcombine.low %v2128, %v2136
        %v2154 = vcombine.high %v2128, %v2136
        %v2156 = vunpack.c.l.s4 1934713408
        %v2157 = vunpack.c.0.s8 %v2156
        %v2158 = vlaneseq
        %v2159 = vshrl.u32 %v2158, 7
        %v2160 = vsub.s32 %v2157, %v2159
        %v2161 = vrot.slane %v2153, %v2160
        %v2163 = vunpack.c.l.s4 1934713408
        %v2164 = vunpack.c.0.s8 %v2163
        %v2165 = vlaneseq
        %v2166 = vshrl.u32 %v2165, 7
        %v2167 = vsub.s32 %v2164, %v2166
        %v2168 = vrot.slane %v2154, %v2167
        %v2169 = vcombine.low %v2145, %v2161
        %v2170 = vcombine.high %v2145, %v2161
        %v2171 = vcombine.low %v2152, %v2168
        %v2172 = vcombine.high %v2152, %v2168
        %v2173 = vcombine.low %v1669, %v1676
        %v2175 = vunpack.c.l.s4 1983009808
        %v2176 = vunpack.c.0.s8 %v2175
        %v2177 = vlaneseq
        %v2178 = vshrl.u32 %v2177, 7
        %v2179 = vsub.s32 %v2176, %v2178
        %v2180 = vrot.slane %v2173, %v2179
        %v2181 = vcombine.low %v1693, %v1694
        %v2183 = vunpack.c.l.s4 1983009808
        %v2184 = vunpack.c.0.s8 %v2183
        %v2185 = vlaneseq
        %v2186 = vshrl.u32 %v2185, 7
        %v2187 = vsub.s32 %v2184, %v2186
        %v2188 = vrot.slane %v2181, %v2187
        %v2189 = vcombine.low %v1685, %v1692
        %v2191 = vunpack.c.l.s4 1983009808
        %v2192 = vunpack.c.0.s8 %v2191
        %v2193 = vlaneseq
        %v2194 = vshrl.u32 %v2193, 7
        %v2195 = vsub.s32 %v2192, %v2194
        %v2196 = vrot.slane %v2189, %v2195
        %v2197 = vcombine.low %v1695, %v1696
        %v2199 = vunpack.c.l.s4 1983009808
        %v2200 = vunpack.c.0.s8 %v2199
        %v2201 = vlaneseq
        %v2202 = vshrl.u32 %v2201, 7
        %v2203 = vsub.s32 %v2200, %v2202
        %v2204 = vrot.slane %v2197, %v2203
        %v2205 = vcombine.low %v2180, %v2188
        %v2206 = vcombine.high %v2180, %v2188
        %v2208 = vunpack.c.l.s4 1934713408
        %v2209 = vunpack.c.0.s8 %v2208
        %v2210 = vlaneseq
        %v2211 = vshrl.u32 %v2210, 7
        %v2212 = vsub.s32 %v2209, %v2211
        %v2213 = vrot.slane %v2205, %v2212
        %v2215 = vunpack.c.l.s4 1934713408
        %v2216 = vunpack.c.0.s8 %v2215
        %v2217 = vlaneseq
        %v2218 = vshrl.u32 %v2217, 7
        %v2219 = vsub.s32 %v2216, %v2218
        %v2220 = vrot.slane %v2206, %v2219
        %v2221 = vcombine.low %v2196, %v2204
        %v2222 = vcombine.high %v2196, %v2204
        %v2224 = vunpack.c.l.s4 1934713408
        %v2225 = vunpack.c.0.s8 %v2224
        %v2226 = vlaneseq
        %v2227 = vshrl.u32 %v2226, 7
        %v2228 = vsub.s32 %v2225, %v2227
        %v2229 = vrot.slane %v2221, %v2228
        %v2231 = vunpack.c.l.s4 1934713408
        %v2232 = vunpack.c.0.s8 %v2231
        %v2233 = vlaneseq
        %v2234 = vshrl.u32 %v2233, 7
        %v2235 = vsub.s32 %v2232, %v2234
        %v2236 = vrot.slane %v2222, %v2235
        %v2237 = vcombine.low %v2213, %v2229
        %v2238 = vcombine.high %v2213, %v2229
        %v2239 = vcombine.low %v2220, %v2236
        %v2240 = vcombine.high %v2220, %v2236
        %v2241 = vcombine.low %v1737, %v1744
        %v2243 = vunpack.c.l.s4 1983009808
        %v2244 = vunpack.c.0.s8 %v2243
        %v2245 = vlaneseq
        %v2246 = vshrl.u32 %v2245, 7
        %v2247 = vsub.s32 %v2244, %v2246
        %v2248 = vrot.slane %v2241, %v2247
        %v2249 = vcombine.low %v1761, %v1762
        %v2251 = vunpack.c.l.s4 1983009808
        %v2252 = vunpack.c.0.s8 %v2251
        %v2253 = vlaneseq
        %v2254 = vshrl.u32 %v2253, 7
        %v2255 = vsub.s32 %v2252, %v2254
        %v2256 = vrot.slane %v2249, %v2255
        %v2257 = vcombine.low %v1753, %v1760
        %v2259 = vunpack.c.l.s4 1983009808
        %v2260 = vunpack.c.0.s8 %v2259
        %v2261 = vlaneseq
        %v2262 = vshrl.u32 %v2261, 7
        %v2263 = vsub.s32 %v2260, %v2262
        %v2264 = vrot.slane %v2257, %v2263
        %v2265 = vcombine.low %v1763, %v1764
        %v2267 = vunpack.c.l.s4 1983009808
        %v2268 = vunpack.c.0.s8 %v2267
        %v2269 = vlaneseq
        %v2270 = vshrl.u32 %v2269, 7
        %v2271 = vsub.s32 %v2268, %v2270
        %v2272 = vrot.slane %v2265, %v2271
        %v2273 = vcombine.low %v2248, %v2256
        %v2274 = vcombine.high %v2248, %v2256
        %v2276 = vunpack.c.l.s4 1934713408
        %v2277 = vunpack.c.0.s8 %v2276
        %v2278 = vlaneseq
        %v2279 = vshrl.u32 %v2278, 7
        %v2280 = vsub.s32 %v2277, %v2279
        %v2281 = vrot.slane %v2273, %v2280
        %v2283 = vunpack.c.l.s4 1934713408
        %v2284 = vunpack.c.0.s8 %v2283
        %v2285 = vlaneseq
        %v2286 = vshrl.u32 %v2285, 7
        %v2287 = vsub.s32 %v2284, %v2286
        %v2288 = vrot.slane %v2274, %v2287
        %v2289 = vcombine.low %v2264, %v2272
        %v2290 = vcombine.high %v2264, %v2272
        %v2292 = vunpack.c.l.s4 1934713408
        %v2293 = vunpack.c.0.s8 %v2292
        %v2294 = vlaneseq
        %v2295 = vshrl.u32 %v2294, 7
        %v2296 = vsub.s32 %v2293, %v2295
        %v2297 = vrot.slane %v2289, %v2296
        %v2299 = vunpack.c.l.s4 1934713408
        %v2300 = vunpack.c.0.s8 %v2299
        %v2301 = vlaneseq
        %v2302 = vshrl.u32 %v2301, 7
        %v2303 = vsub.s32 %v2300, %v2302
        %v2304 = vrot.slane %v2290, %v2303
        %v2305 = vcombine.low %v2281, %v2297
        %v2306 = vcombine.high %v2281, %v2297
        %v2307 = vcombine.low %v2288, %v2304
        %v2308 = vcombine.high %v2288, %v2304
        %v2309 = vcombine.low %v1805, %v1812
        %v2311 = vunpack.c.l.s4 1983009808
        %v2312 = vunpack.c.0.s8 %v2311
        %v2313 = vlaneseq
        %v2314 = vshrl.u32 %v2313, 7
        %v2315 = vsub.s32 %v2312, %v2314
        %v2316 = vrot.slane %v2309, %v2315
        %v2317 = vcombine.low %v1829, %v1830
        %v2319 = vunpack.c.l.s4 1983009808
        %v2320 = vunpack.c.0.s8 %v2319
        %v2321 = vlaneseq
        %v2322 = vshrl.u32 %v2321, 7
        %v2323 = vsub.s32 %v2320, %v2322
        %v2324 = vrot.slane %v2317, %v2323
        %v2325 = vcombine.low %v1821, %v1828
        %v2327 = vunpack.c.l.s4 1983009808
        %v2328 = vunpack.c.0.s8 %v2327
        %v2329 = vlaneseq
        %v2330 = vshrl.u32 %v2329, 7
        %v2331 = vsub.s32 %v2328, %v2330
        %v2332 = vrot.slane %v2325, %v2331
        %v2333 = vcombine.low %v1831, %v1832
        %v2335 = vunpack.c.l.s4 1983009808
        %v2336 = vunpack.c.0.s8 %v2335
        %v2337 = vlaneseq
        %v2338 = vshrl.u32 %v2337, 7
        %v2339 = vsub.s32 %v2336, %v2338
        %v2340 = vrot.slane %v2333, %v2339
        %v2341 = vcombine.low %v2316, %v2324
        %v2342 = vcombine.high %v2316, %v2324
        %v2344 = vunpack.c.l.s4 1934713408
        %v2345 = vunpack.c.0.s8 %v2344
        %v2346 = vlaneseq
        %v2347 = vshrl.u32 %v2346, 7
        %v2348 = vsub.s32 %v2345, %v2347
        %v2349 = vrot.slane %v2341, %v2348
        %v2351 = vunpack.c.l.s4 1934713408
        %v2352 = vunpack.c.0.s8 %v2351
        %v2353 = vlaneseq
        %v2354 = vshrl.u32 %v2353, 7
        %v2355 = vsub.s32 %v2352, %v2354
        %v2356 = vrot.slane %v2342, %v2355
        %v2357 = vcombine.low %v2332, %v2340
        %v2358 = vcombine.high %v2332, %v2340
        %v2360 = vunpack.c.l.s4 1934713408
        %v2361 = vunpack.c.0.s8 %v2360
        %v2362 = vlaneseq
        %v2363 = vshrl.u32 %v2362, 7
        %v2364 = vsub.s32 %v2361, %v2363
        %v2365 = vrot.slane %v2357, %v2364
        %v2367 = vunpack.c.l.s4 1934713408
        %v2368 = vunpack.c.0.s8 %v2367
        %v2369 = vlaneseq
        %v2370 = vshrl.u32 %v2369, 7
        %v2371 = vsub.s32 %v2368, %v2370
        %v2372 = vrot.slane %v2358, %v2371
        %v2373 = vcombine.low %v2349, %v2365
        %v2374 = vcombine.high %v2349, %v2365
        %v2375 = vcombine.low %v2356, %v2372
        %v2376 = vcombine.high %v2356, %v2372
        %v2377 = vcombine.low %v1873, %v1880
        %v2379 = vunpack.c.l.s4 1983009808
        %v2380 = vunpack.c.0.s8 %v2379
        %v2381 = vlaneseq
        %v2382 = vshrl.u32 %v2381, 7
        %v2383 = vsub.s32 %v2380, %v2382
        %v2384 = vrot.slane %v2377, %v2383
        %v2385 = vcombine.low %v1897, %v1898
        %v2387 = vunpack.c.l.s4 1983009808
        %v2388 = vunpack.c.0.s8 %v2387
        %v2389 = vlaneseq
        %v2390 = vshrl.u32 %v2389, 7
        %v2391 = vsub.s32 %v2388, %v2390
        %v2392 = vrot.slane %v2385, %v2391
        %v2393 = vcombine.low %v1889, %v1896
        %v2395 = vunpack.c.l.s4 1983009808
        %v2396 = vunpack.c.0.s8 %v2395
        %v2397 = vlaneseq
        %v2398 = vshrl.u32 %v2397, 7
        %v2399 = vsub.s32 %v2396, %v2398
        %v2400 = vrot.slane %v2393, %v2399
        %v2401 = vcombine.low %v1899, %v1900
        %v2403 = vunpack.c.l.s4 1983009808
        %v2404 = vunpack.c.0.s8 %v2403
        %v2405 = vlaneseq
        %v2406 = vshrl.u32 %v2405, 7
        %v2407 = vsub.s32 %v2404, %v2406
        %v2408 = vrot.slane %v2401, %v2407
        %v2409 = vcombine.low %v2384, %v2392
        %v2410 = vcombine.high %v2384, %v2392
        %v2412 = vunpack.c.l.s4 1934713408
        %v2413 = vunpack.c.0.s8 %v2412
        %v2414 = vlaneseq
        %v2415 = vshrl.u32 %v2414, 7
        %v2416 = vsub.s32 %v2413, %v2415
        %v2417 = vrot.slane %v2409, %v2416
        %v2419 = vunpack.c.l.s4 1934713408
        %v2420 = vunpack.c.0.s8 %v2419
        %v2421 = vlaneseq
        %v2422 = vshrl.u32 %v2421, 7
        %v2423 = vsub.s32 %v2420, %v2422
        %v2424 = vrot.slane %v2410, %v2423
        %v2425 = vcombine.low %v2400, %v2408
        %v2426 = vcombine.high %v2400, %v2408
        %v2428 = vunpack.c.l.s4 1934713408
        %v2429 = vunpack.c.0.s8 %v2428
        %v2430 = vlaneseq
        %v2431 = vshrl.u32 %v2430, 7
        %v2432 = vsub.s32 %v2429, %v2431
        %v2433 = vrot.slane %v2425, %v2432
        %v2435 = vunpack.c.l.s4 1934713408
        %v2436 = vunpack.c.0.s8 %v2435
        %v2437 = vlaneseq
        %v2438 = vshrl.u32 %v2437, 7
        %v2439 = vsub.s32 %v2436, %v2438
        %v2440 = vrot.slane %v2426, %v2439
        %v2441 = vcombine.low %v2417, %v2433
        %v2442 = vcombine.high %v2417, %v2433
        %v2443 = vcombine.low %v2424, %v2440
        %v2444 = vcombine.high %v2424, %v2440
        %v2445 = vcombine.low %v1941, %v1948
        %v2447 = vunpack.c.l.s4 1983009808
        %v2448 = vunpack.c.0.s8 %v2447
        %v2449 = vlaneseq
        %v2450 = vshrl.u32 %v2449, 7
        %v2451 = vsub.s32 %v2448, %v2450
        %v2452 = vrot.slane %v2445, %v2451
        %v2453 = vcombine.low %v1965, %v1966
        %v2455 = vunpack.c.l.s4 1983009808
        %v2456 = vunpack.c.0.s8 %v2455
        %v2457 = vlaneseq
        %v2458 = vshrl.u32 %v2457, 7
        %v2459 = vsub.s32 %v2456, %v2458
        %v2460 = vrot.slane %v2453, %v2459
        %v2461 = vcombine.low %v1957, %v1964
        %v2463 = vunpack.c.l.s4 1983009808
        %v2464 = vunpack.c.0.s8 %v2463
        %v2465 = vlaneseq
        %v2466 = vshrl.u32 %v2465, 7
        %v2467 = vsub.s32 %v2464, %v2466
        %v2468 = vrot.slane %v2461, %v2467
        %v2469 = vcombine.low %v1967, %v1968
        %v2471 = vunpack.c.l.s4 1983009808
        %v2472 = vunpack.c.0.s8 %v2471
        %v2473 = vlaneseq
        %v2474 = vshrl.u32 %v2473, 7
        %v2475 = vsub.s32 %v2472, %v2474
        %v2476 = vrot.slane %v2469, %v2475
        %v2477 = vcombine.low %v2452, %v2460
        %v2478 = vcombine.high %v2452, %v2460
        %v2480 = vunpack.c.l.s4 1934713408
        %v2481 = vunpack.c.0.s8 %v2480
        %v2482 = vlaneseq
        %v2483 = vshrl.u32 %v2482, 7
        %v2484 = vsub.s32 %v2481, %v2483
        %v2485 = vrot.slane %v2477, %v2484
        %v2487 = vunpack.c.l.s4 1934713408
        %v2488 = vunpack.c.0.s8 %v2487
        %v2489 = vlaneseq
        %v2490 = vshrl.u32 %v2489, 7
        %v2491 = vsub.s32 %v2488, %v2490
        %v2492 = vrot.slane %v2478, %v2491
        %v2493 = vcombine.low %v2468, %v2476
        %v2494 = vcombine.high %v2468, %v2476
        %v2496 = vunpack.c.l.s4 1934713408
        %v2497 = vunpack.c.0.s8 %v2496
        %v2498 = vlaneseq
        %v2499 = vshrl.u32 %v2498, 7
        %v2500 = vsub.s32 %v2497, %v2499
        %v2501 = vrot.slane %v2493, %v2500
        %v2503 = vunpack.c.l.s4 1934713408
        %v2504 = vunpack.c.0.s8 %v2503
        %v2505 = vlaneseq
        %v2506 = vshrl.u32 %v2505, 7
        %v2507 = vsub.s32 %v2504, %v2506
        %v2508 = vrot.slane %v2494, %v2507
        %v2509 = vcombine.low %v2485, %v2501
        %v2510 = vcombine.high %v2485, %v2501
        %v2511 = vcombine.low %v2492, %v2508
        %v2512 = vcombine.high %v2492, %v2508
        %v2513 = vcombine.low %v2009, %v2016
        %v2515 = vunpack.c.l.s4 1983009808
        %v2516 = vunpack.c.0.s8 %v2515
        %v2517 = vlaneseq
        %v2518 = vshrl.u32 %v2517, 7
        %v2519 = vsub.s32 %v2516, %v2518
        %v2520 = vrot.slane %v2513, %v2519
        %v2521 = vcombine.low %v2033, %v2034
        %v2523 = vunpack.c.l.s4 1983009808
        %v2524 = vunpack.c.0.s8 %v2523
        %v2525 = vlaneseq
        %v2526 = vshrl.u32 %v2525, 7
        %v2527 = vsub.s32 %v2524, %v2526
        %v2528 = vrot.slane %v2521, %v2527
        %v2529 = vcombine.low %v2025, %v2032
        %v2531 = vunpack.c.l.s4 1983009808
        %v2532 = vunpack.c.0.s8 %v2531
        %v2533 = vlaneseq
        %v2534 = vshrl.u32 %v2533, 7
        %v2535 = vsub.s32 %v2532, %v2534
        %v2536 = vrot.slane %v2529, %v2535
        %v2537 = vcombine.low %v2035, %v2036
        %v2539 = vunpack.c.l.s4 1983009808
        %v2540 = vunpack.c.0.s8 %v2539
        %v2541 = vlaneseq
        %v2542 = vshrl.u32 %v2541, 7
        %v2543 = vsub.s32 %v2540, %v2542
        %v2544 = vrot.slane %v2537, %v2543
        %v2545 = vcombine.low %v2520, %v2528
        %v2546 = vcombine.high %v2520, %v2528
        %v2548 = vunpack.c.l.s4 1934713408
        %v2549 = vunpack.c.0.s8 %v2548
        %v2550 = vlaneseq
        %v2551 = vshrl.u32 %v2550, 7
        %v2552 = vsub.s32 %v2549, %v2551
        %v2553 = vrot.slane %v2545, %v2552
        %v2555 = vunpack.c.l.s4 1934713408
        %v2556 = vunpack.c.0.s8 %v2555
        %v2557 = vlaneseq
        %v2558 = vshrl.u32 %v2557, 7
        %v2559 = vsub.s32 %v2556, %v2558
        %v2560 = vrot.slane %v2546, %v2559
        %v2561 = vcombine.low %v2536, %v2544
        %v2562 = vcombine.high %v2536, %v2544
        %v2564 = vunpack.c.l.s4 1934713408
        %v2565 = vunpack.c.0.s8 %v2564
        %v2566 = vlaneseq
        %v2567 = vshrl.u32 %v2566, 7
        %v2568 = vsub.s32 %v2565, %v2567
        %v2569 = vrot.slane %v2561, %v2568
        %v2571 = vunpack.c.l.s4 1934713408
        %v2572 = vunpack.c.0.s8 %v2571
        %v2573 = vlaneseq
        %v2574 = vshrl.u32 %v2573, 7
        %v2575 = vsub.s32 %v2572, %v2574
        %v2576 = vrot.slane %v2562, %v2575
        %v2577 = vcombine.low %v2553, %v2569
        %v2578 = vcombine.high %v2553, %v2569
        %v2579 = vcombine.low %v2560, %v2576
        %v2580 = vcombine.high %v2560, %v2576
        %v2581 = vcombine.low %v2077, %v2084
        %v2583 = vunpack.c.l.s4 1983009808
        %v2584 = vunpack.c.0.s8 %v2583
        %v2585 = vlaneseq
        %v2586 = vshrl.u32 %v2585, 7
        %v2587 = vsub.s32 %v2584, %v2586
        %v2588 = vrot.slane %v2581, %v2587
        %v2589 = vcombine.low %v2101, %v2102
        %v2591 = vunpack.c.l.s4 1983009808
        %v2592 = vunpack.c.0.s8 %v2591
        %v2593 = vlaneseq
        %v2594 = vshrl.u32 %v2593, 7
        %v2595 = vsub.s32 %v2592, %v2594
        %v2596 = vrot.slane %v2589, %v2595
        %v2597 = vcombine.low %v2093, %v2100
        %v2599 = vunpack.c.l.s4 1983009808
        %v2600 = vunpack.c.0.s8 %v2599
        %v2601 = vlaneseq
        %v2602 = vshrl.u32 %v2601, 7
        %v2603 = vsub.s32 %v2600, %v2602
        %v2604 = vrot.slane %v2597, %v2603
        %v2605 = vcombine.low %v2103, %v2104
        %v2607 = vunpack.c.l.s4 1983009808
        %v2608 = vunpack.c.0.s8 %v2607
        %v2609 = vlaneseq
        %v2610 = vshrl.u32 %v2609, 7
        %v2611 = vsub.s32 %v2608, %v2610
        %v2612 = vrot.slane %v2605, %v2611
        %v2613 = vcombine.low %v2588, %v2596
        %v2614 = vcombine.high %v2588, %v2596
        %v2616 = vunpack.c.l.s4 1934713408
        %v2617 = vunpack.c.0.s8 %v2616
        %v2618 = vlaneseq
        %v2619 = vshrl.u32 %v2618, 7
        %v2620 = vsub.s32 %v2617, %v2619
        %v2621 = vrot.slane %v2613, %v2620
        %v2623 = vunpack.c.l.s4 1934713408
        %v2624 = vunpack.c.0.s8 %v2623
        %v2625 = vlaneseq
        %v2626 = vshrl.u32 %v2625, 7
        %v2627 = vsub.s32 %v2624, %v2626
        %v2628 = vrot.slane %v2614, %v2627
        %v2629 = vcombine.low %v2604, %v2612
        %v2630 = vcombine.high %v2604, %v2612
        %v2632 = vunpack.c.l.s4 1934713408
        %v2633 = vunpack.c.0.s8 %v2632
        %v2634 = vlaneseq
        %v2635 = vshrl.u32 %v2634, 7
        %v2636 = vsub.s32 %v2633, %v2635
        %v2637 = vrot.slane %v2629, %v2636
        %v2639 = vunpack.c.l.s4 1934713408
        %v2640 = vunpack.c.0.s8 %v2639
        %v2641 = vlaneseq
        %v2642 = vshrl.u32 %v2641, 7
        %v2643 = vsub.s32 %v2640, %v2642
        %v2644 = vrot.slane %v2630, %v2643
        %v2645 = vcombine.low %v2621, %v2637
        %v2646 = vcombine.high %v2621, %v2637
        %v2647 = vcombine.low %v2628, %v2644
        %v2648 = vcombine.high %v2628, %v2644
        %2657 = vrot.lane.b32.xlu0 %v2170, 48
        %v2658 = vpop.permute.xlu0 %2657
        %2659 = vrot.lane.b32.xlu0 %v2238, 48
        %v2660 = vpop.permute.xlu0 %2659
        %2661 = vrot.lane.b32.xlu0 %v2306, 48
        %v2662 = vpop.permute.xlu0 %2661
        %2663 = vrot.lane.b32.xlu0 %v2374, 48
        %v2664 = vpop.permute.xlu0 %2663
        %2665 = vrot.lane.b32.xlu0 %v2442, 48
        %v2666 = vpop.permute.xlu0 %2665
        %2667 = vrot.lane.b32.xlu0 %v2510, 48
        %v2668 = vpop.permute.xlu0 %2667
        %2669 = vrot.lane.b32.xlu0 %v2578, 48
        %v2670 = vpop.permute.xlu0 %2669
        %2671 = vrot.lane.b32.xlu0 %v2646, 48
        %v2672 = vpop.permute.xlu0 %2671
        %2689 = vrot.lane.b32.xlu0 %v2171, 96
        %v2690 = vpop.permute.xlu0 %2689
        %2691 = vrot.lane.b32.xlu0 %v2239, 96
        %v2692 = vpop.permute.xlu0 %2691
        %2693 = vrot.lane.b32.xlu0 %v2307, 96
        %v2694 = vpop.permute.xlu0 %2693
        %2695 = vrot.lane.b32.xlu0 %v2375, 96
        %v2696 = vpop.permute.xlu0 %2695
        %2697 = vrot.lane.b32.xlu0 %v2443, 96
        %v2698 = vpop.permute.xlu0 %2697
        %2699 = vrot.lane.b32.xlu0 %v2511, 96
        %v2700 = vpop.permute.xlu0 %2699
        %2701 = vrot.lane.b32.xlu0 %v2579, 96
        %v2702 = vpop.permute.xlu0 %2701
        %2703 = vrot.lane.b32.xlu0 %v2647, 96
        %v2704 = vpop.permute.xlu0 %2703
        %2721 = vrot.lane.b32.xlu0 %v2172, 16
        %v2722 = vpop.permute.xlu0 %2721
        %2723 = vrot.lane.b32.xlu0 %v2240, 16
        %v2724 = vpop.permute.xlu0 %2723
        %2725 = vrot.lane.b32.xlu0 %v2308, 16
        %v2726 = vpop.permute.xlu0 %2725
        %2727 = vrot.lane.b32.xlu0 %v2376, 16
        %v2728 = vpop.permute.xlu0 %2727
        %2729 = vrot.lane.b32.xlu0 %v2444, 16
        %v2730 = vpop.permute.xlu0 %2729
        %2731 = vrot.lane.b32.xlu0 %v2512, 16
        %v2732 = vpop.permute.xlu0 %2731
        %2733 = vrot.lane.b32.xlu0 %v2580, 16
        %v2734 = vpop.permute.xlu0 %2733
        %2735 = vrot.lane.b32.xlu0 %v2648, 16
        %v2736 = vpop.permute.xlu0 %2735
        %vm2745 = vcmask 392192
        %v2746 = vsel %vm2745, %v2169, %v2658
        %v2747 = vsel %vm2745, %v2237, %v2660
        %v2748 = vsel %vm2745, %v2305, %v2662
        %v2749 = vsel %vm2745, %v2373, %v2664
        %v2750 = vsel %vm2745, %v2441, %v2666
        %v2751 = vsel %vm2745, %v2509, %v2668
        %v2752 = vsel %vm2745, %v2577, %v2670
        %v2753 = vsel %vm2745, %v2645, %v2672
        %vm2754 = vcmask 785408
        %v2755 = vsel %vm2754, %v2746, %v2690
        %v2756 = vsel %vm2754, %v2747, %v2692
        %v2757 = vsel %vm2754, %v2748, %v2694
        %v2758 = vsel %vm2754, %v2749, %v2696
        %v2759 = vsel %vm2754, %v2750, %v2698
        %v2760 = vsel %vm2754, %v2751, %v2700
        %v2761 = vsel %vm2754, %v2752, %v2702
        %v2762 = vsel %vm2754, %v2753, %v2704
        %v2763 = vsel %vm940, %v2690, %v2722
        %v2764 = vsel %vm940, %v2692, %v2724
        %v2765 = vsel %vm940, %v2694, %v2726
        %v2766 = vsel %vm940, %v2696, %v2728
        %v2767 = vsel %vm940, %v2698, %v2730
        %v2768 = vsel %vm940, %v2700, %v2732
        %v2769 = vsel %vm940, %v2702, %v2734
        %v2770 = vsel %vm940, %v2704, %v2736
        %2771 = vst [vmem:[%s182] sm:$0xff] %v2755
        %vm2772 = vcmask 523264
        %2773 = vst.msk [vmem:[%s182 + $0x8] sm:$0xff] %vm2772, %v2763
        %2774 = vst [vmem:[%s182 + $0x10] sm:$0xff] %v2756
        %2775 = vst.msk [vmem:[%s182 + $0x18] sm:$0xff] %vm2772, %v2764
        %2776 = vst [vmem:[%s182 + $0x20] sm:$0xff] %v2757
        %2777 = vst.msk [vmem:[%s182 + $0x28] sm:$0xff] %vm2772, %v2765
        %2778 = vst [vmem:[%s182 + $0x30] sm:$0xff] %v2758
        %2779 = vst.msk [vmem:[%s182 + $0x38] sm:$0xff] %vm2772, %v2766
        %2780 = vst [vmem:[%s182 + $0x40] sm:$0xff] %v2759
        %2781 = vst.msk [vmem:[%s182 + $0x48] sm:$0xff] %vm2772, %v2767
        %2782 = vst [vmem:[%s182 + $0x50] sm:$0xff] %v2760
        %2783 = vst.msk [vmem:[%s182 + $0x58] sm:$0xff] %vm2772, %v2768
        %2784 = vst [vmem:[%s182 + $0x60] sm:$0xff] %v2761
        %2785 = vst.msk [vmem:[%s182 + $0x68] sm:$0xff] %vm2772, %v2769
        %2786 = vst [vmem:[%s182 + $0x70] sm:$0xff] %v2762
        %2787 = vst.msk [vmem:[%s182 + $0x78] sm:$0xff] %vm2772, %v2770
        %s2788 = smul.u32 8, %s17
        %p2789 = scmp.lt.s32.totalorder %s2788, 15
        %s2790 = scalar_select %p2789, %s2788, 15
        %s2791 = smul.addr %s2790, 2
        %s2792 = smul.addr %s2791, 8
        %s2793 = scalar_lea.vmem %s2, %s2792
        // Predicated region
        $region37: #{tpu_custom_call.1} parent=27 // pred_check
          %p2794 = pneg %p82
        $region38: #{tpu_custom_call.1} parent=27 // pred_check_branch
          %2796 = sbr.rel (%p2794) target = $region40
        $region39: #{tpu_custom_call.1} parent=27 // pred_region
          %s2797 = smul.u32 8, %s17
        $region40: #{tpu_custom_call.1} parent=27 // pred_fallthru
          _
      $region28: #{tpu_custom_call.1} parent=5 // pred_fallthru
        _
      %p2798 = scmp.le.s32.totalorder 2, %s12
      // Predicated region
      $region41: #{tpu_custom_call.1} parent=5 // pred_check
        %p2799 = pneg %p2798
      $region42: #{tpu_custom_call.1} parent=5 // pred_check_branch
        %2801 = sbr.rel (%p2799) target = $region44
      $region43: #{tpu_custom_call.1} parent=5 // pred_region
        %s2802 = ssub.s32 %s12, 2
        // Predicated region
        $region45: #{tpu_custom_call.1} parent=43 // pred_check
          %p2803 = pneg %p88
        $region46: #{tpu_custom_call.1} parent=43 // pred_check_branch
          %2805 = sbr.rel (%p2803) target = $region48
        $region47: #{tpu_custom_call.1} parent=43 // pred_region
          %s2806 = smul.u32 8, %s18
          %p2807 = scmp.lt.s32.totalorder %s2806, 15
          %s2808 = scalar_select %p2807, %s2806, 15
          %s2809 = smul.addr %s2808, 2
          %s2810 = smul.addr %s2809, 8
          %s2811 = scalar_lea.vmem %s2, %s2810
        $region48: #{tpu_custom_call.1} parent=43 // pred_fallthru
          _
      $region44: #{tpu_custom_call.1} parent=5 // pred_fallthru
        _
    $region6: #{tpu_custom_call.1} parent=1 // loop_footer
      %s16 = sadd.s32 1, %s12
    $region7: #{tpu_custom_call.1} parent=1 // loop_footer_branch
      %11 = sbr.rel target = $region3
    $region8: #{tpu_custom_call.1} parent=1 // loop_exit
      _
    %2812 = vsyncpa [#allocation3], 1
    %s2813 = scalar_lea.sflag [#allocation3], 1
    %2814 = vsyncpa %s2813, 1
    %2815 = vsyncpa [#allocation5], 1

</llo_original>
